<compile_context>
chip_gen: v5e
topology: v5e:2x2
jax: 0.10.0
libtpu: 0.0.40
codegen_flags: <defaults>
</compile_context>

<pallas_src>
import functools

import jax
import jax.numpy as jnp
from jax.experimental import pallas as pl
from jax.experimental.pallas import tpu as pltpu


def _cdiv(a, b):
    return -(-a // b)


def _round_up(a, m):
    return _cdiv(a, m) * m


def _ffn_kernel(x_ref, w1_ref, b1_ref, w2_ref, b2_ref, o_ref):
    """One grid step = one tile of packed (B*T / G) rows.

    x_ref : (RT, G*K*C)   bf16  packed im2col'd input rows
    w1_ref: (G*K*C, G*H)  bf16  block-diagonal folded conv weight (resident)
    b1_ref: (1, G*H)      f32   conv bias (tiled G times)
    w2_ref: (G*H, G*C)    bf16  block-diagonal linear weight (resident)
    b2_ref: (1, G*C)      f32   linear bias (tiled G times)
    o_ref : (RT, G*C)           packed output rows (128-lane dense when G > 1)
    """
    # Conv1d: all K taps folded into one contraction -> single MXU push, f32 acc.
    h = jnp.dot(x_ref[...], w1_ref[...], preferred_element_type=jnp.float32)
    # Bias + ReLU epilogue in f32 on the VPU.
    h = jnp.maximum(h + b1_ref[...], 0.0)
    # Dropout (inference) is identity -> straight into the Linear layer.
    y = jnp.dot(h.astype(jnp.bfloat16), w2_ref[...],
                preferred_element_type=jnp.float32)
    o_ref[...] = (y + b2_ref[...]).astype(o_ref.dtype)


def conv1d_linear(x, w1_torch, b1, w2_torch, b2, kernel_size, *,
                  row_tile=512, out_dtype=None, vmem_limit_bytes=64 << 20):
    """Fused Conv1dLinear forward.

    x        : (B, T, in_chans)
    w1_torch : (hidden, in_chans, K)   torch.nn.Conv1d weight layout
    b1       : (hidden,)
    w2_torch : (in_chans, hidden)      torch.nn.Linear weight layout
    b2       : (in_chans,)
    """
    B, T, C = x.shape
    H, Cw, K = w1_torch.shape
    assert Cw == C and K == kernel_size
    assert kernel_size % 2 == 1, "pad=(K-1)//2 only matches torch.nn.Conv1d for odd K"
    pad = (kernel_size - 1) // 2
    out_dtype = x.dtype if out_dtype is None else out_dtype

    # Lane-packing factor: pack G consecutive rows into one 128-lane super-row
    # when in_chans is narrow; G == 1 recovers the plain layout for C >= 128.
    G = 128 // C if (C < 128 and 128 % C == 0) else 1

    rows = B * T
    min_tile = 8 * G                  # packed sublane dim must stay a multiple of 8
    out_isz = jnp.dtype(out_dtype).itemsize
    row_tile = max(min_tile, _round_up(row_tile, min_tile))

    # ---- VMEM budget (v7x: 64 MiB physical, so leave headroom): shrink tile ----
    def vmem_estimate(rt):
        rp = rt // G
        x_b = 2 * rp * (G * K * C) * 2                  # bf16 input, double-buffered
        o_b = 2 * rp * (G * C) * out_isz                # output, double-buffered
        w_b = ((G * K * C) * (G * H) + (G * H) * (G * C)) * 2 \
              + (G * H + G * C) * 4                     # resident, Buffered(1)
        h_b = rp * (G * H) * 4                          # f32 intermediate
        return x_b + o_b + w_b + h_b

    while row_tile > min_tile and vmem_estimate(row_tile) > int(0.6 * vmem_limit_bytes):
        row_tile = max(min_tile, _round_up(row_tile // 2, min_tile))
    # Keep >= ~8 grid steps (>= 4 per v7x TensorCore) when the problem allows it.
    while row_tile > min_tile and _cdiv(rows, row_tile) < 8:
        row_tile = max(min_tile, _round_up(row_tile // 2, min_tile))

    n_tiles = _cdiv(rows, row_tile)
    if n_tiles > 1 and n_tiles % 2 == 1:
        n_tiles += 1                                    # even steps -> both v7x TCs busy
    rows_p = n_tiles * row_tile

    # ---- wrapper-side data plumbing (no arithmetic): bf16 cast + pad + im2col ----
    # allow_input_fusion lets XLA fuse this producer chain into the input DMA so
    # x_col need not be materialised in HBM.
    x_bf = x.astype(jnp.bfloat16)
    x_pad = jnp.pad(x_bf, ((0, 0), (pad, pad), (0, 0)))
    # x_col[b, t, k*C + c] = x_pad[b, t + k, c]
    x_col = jnp.concatenate([x_pad[:, k:k + T, :] for k in range(K)], axis=-1)
    x_rows = x_col.reshape(rows, K * C)
    if rows_p != rows:
        x_rows = jnp.pad(x_rows, ((0, rows_p - rows), (0, 0)))
    x_packed = x_rows.reshape(rows_p // G, G * K * C)   # contiguous (free) reshape

    # ---- weight prep: fold taps, block-diagonal lane packing, bf16 for the MXU ----
    # w1_col[k*C + c, h] = w1_torch[h, c, k]
    w1_col = jnp.transpose(w1_torch, (2, 1, 0)).reshape(K * C, H)
    w2_t = w2_torch.T                                   # (H, C)
    if G > 1:
        eye = jnp.eye(G, dtype=w1_col.dtype)
        w1_k = jnp.kron(eye, w1_col)                    # (G*K*C, G*H) block-diagonal
        w2_k = jnp.kron(eye, w2_t)                      # (G*H,  G*C) block-diagonal
        b1_k = jnp.tile(b1, G)
        b2_k = jnp.tile(b2, G)
    else:
        w1_k, w2_k, b1_k, b2_k = w1_col, w2_t, b1, b2
    w1_k = w1_k.astype(jnp.bfloat16)
    w2_k = w2_k.astype(jnp.bfloat16)
    b1_2d = b1_k.reshape(1, G * H).astype(jnp.float32)
    b2_2d = b2_k.reshape(1, G * C).astype(jnp.float32)

    rt_p = row_tile // G
    resident = dict(pipeline_mode=pl.Buffered(1))       # single-buffer constants

    out_packed = pl.pallas_call(
        _ffn_kernel,
        out_shape=jax.ShapeDtypeStruct((rows_p // G, G * C), out_dtype),
        grid_spec=pltpu.PrefetchScalarGridSpec(
            num_scalar_prefetch=0,
            grid=(n_tiles,),
            in_specs=[
                pl.BlockSpec((rt_p, G * K * C), lambda r: (r, 0)),
                pl.BlockSpec((G * K * C, G * H), lambda r: (0, 0), **resident),
                pl.BlockSpec((1, G * H), lambda r: (0, 0), **resident),
                pl.BlockSpec((G * H, G * C), lambda r: (0, 0), **resident),
                pl.BlockSpec((1, G * C), lambda r: (0, 0), **resident),
            ],
            out_specs=pl.BlockSpec((rt_p, G * C), lambda r: (r, 0)),
        ),
        compiler_params=pltpu.CompilerParams(
            dimension_semantics=("parallel",),
            vmem_limit_bytes=vmem_limit_bytes,
            allow_input_fusion=[True, False, False, False, False],
        ),
    )(x_packed, w1_k, b1_2d, w2_k, b2_2d)

    out_rows = out_packed.reshape(rows_p, C)[:rows]     # contiguous (free) unpack
    return out_rows.reshape(B, T, C)


# ----------------------------- references -----------------------------------

def _reference_f32(x, w1_torch, b1, w2_torch, b2, K):
    """Exact (f32) semantics of the PyTorch module."""
    B, T, C = x.shape
    H = w1_torch.shape[0]
    pad = (K - 1) // 2
    xp = jnp.pad(x, ((0, 0), (pad, pad), (0, 0)))
    w1_col = jnp.transpose(w1_torch, (2, 1, 0)).reshape(K * C, H)
    x_col = jnp.concatenate([xp[:, k:k + T, :] for k in range(K)], axis=-1)
    h = jnp.maximum(jnp.einsum("btk,kh->bth", x_col, w1_col) + b1, 0.0)
    return (jnp.einsum("bth,hc->btc", h, w2_torch.T) + b2).astype(x.dtype)


def _reference_bf16(x, w1_torch, b1, w2_torch, b2, K):
    """Same math as the kernel (bf16 MXU operands, f32 accumulation/epilogue)."""
    B, T, C = x.shape
    H = w1_torch.shape[0]
    pad = (K - 1) // 2
    xp = jnp.pad(x.astype(jnp.bfloat16), ((0, 0), (pad, pad), (0, 0)))
    w1_col = jnp.transpose(w1_torch, (2, 1, 0)).reshape(K * C, H).astype(jnp.bfloat16)
    x_col = jnp.concatenate([xp[:, k:k + T, :] for k in range(K)], axis=-1)
    h = jnp.einsum("btk,kh->bth", x_col, w1_col,
                   preferred_element_type=jnp.float32)
    h = jnp.maximum(h + b1, 0.0)
    y = jnp.einsum("bth,hc->btc", h.astype(jnp.bfloat16),
                   w2_torch.T.astype(jnp.bfloat16),
                   preferred_element_type=jnp.float32) + b2
    return y.astype(x.dtype)


if __name__ == "__main__":
    # Module hyper-parameters (mirrors Conv1dLinear.__init__).
    in_chans = 8
    hidden_chans = 32
    kernel_size = 3
    dropout_rate = 0.0  # inference: dropout is identity

    # 4096 flattened rows -> 8 "parallel" grid steps of 512 rows (>=4 per v7x TC).
    B, T = 2, 2048

    key = jax.random.PRNGKey(0)
    kx, kw1, kb1, kw2, kb2 = jax.random.split(key, 5)

    # Input (B, T, in_chans).
    x = jax.random.normal(kx, (B, T, in_chans), dtype=jnp.float32)

    # torch.nn.Conv1d weight layout: (hidden, in_chans, K).
    w1_torch = 0.1 * jax.random.normal(
        kw1, (hidden_chans, in_chans, kernel_size), dtype=jnp.float32)
    b1 = 0.1 * jax.random.normal(kb1, (hidden_chans,), dtype=jnp.float32)

    # torch.nn.Linear weight layout: (in_chans, hidden).
    w2_torch = 0.1 * jax.random.normal(
        kw2, (in_chans, hidden_chans), dtype=jnp.float32)
    b2 = 0.1 * jax.random.normal(kb2, (in_chans,), dtype=jnp.float32)

    fwd = jax.jit(functools.partial(conv1d_linear, kernel_size=kernel_size))
    out = jax.block_until_ready(fwd(x, w1_torch, b1, w2_torch, b2))
    assert out.shape == (B, T, in_chans)

    # Tight check against the bf16-mirrored math (validates kernel wiring + packing).
    ref_bf = _reference_bf16(x, w1_torch, b1, w2_torch, b2, kernel_size)
    assert jnp.allclose(out, ref_bf, atol=5e-3, rtol=5e-3)

    # Coarse check against the exact f32 module semantics (bf16 MXU tolerance).
    ref_f32 = _reference_f32(x, w1_torch, b1, w2_torch, b2, kernel_size)
    assert jnp.allclose(out, ref_f32, atol=3e-2, rtol=3e-2)

    print("KERNEL_OK")
</pallas_src>

<mosaic_0001>
module attributes {stable_mosaic.version = 11 : i64} {
  func.func @_ffn_kernel(%arg0: i32, %arg1: memref<32x384xbf16, #tpu.memory_space<vmem>>, %arg2: memref<384x512xbf16, #tpu.memory_space<vmem>>, %arg3: memref<1x512xf32, #tpu.memory_space<vmem>>, %arg4: memref<512x128xbf16, #tpu.memory_space<vmem>>, %arg5: memref<1x128xf32, #tpu.memory_space<vmem>>, %arg6: memref<32x128xf32, #tpu.memory_space<vmem>>) attributes {dimension_semantics = [#tpu.dimension_semantics<parallel>], iteration_bounds = array<i64: 8>, scalar_prefetch = 0 : i64, scratch_operands = 0 : i64, tpu.core_type = #tpu.core_type<tc>, window_params = [{transform_indices = @transform_0, window_bounds = array<i64: 32, 384>}, {pipeline_mode = #tpu.pipeline_mode<synchronous>, transform_indices = @transform_1, window_bounds = array<i64: 384, 512>}, {pipeline_mode = #tpu.pipeline_mode<synchronous>, transform_indices = @transform_2, window_bounds = array<i64: 1, 512>}, {pipeline_mode = #tpu.pipeline_mode<synchronous>, transform_indices = @transform_3, window_bounds = array<i64: 512, 128>}, {pipeline_mode = #tpu.pipeline_mode<synchronous>, transform_indices = @transform_4, window_bounds = array<i64: 1, 128>}, {transform_indices = @transform_5, window_bounds = array<i64: 32, 128>}]} {
    %c0 = arith.constant 0 : index
    %c0_0 = arith.constant 0 : index
    %0 = vector.load %arg1[%c0, %c0_0] : memref<32x384xbf16, #tpu.memory_space<vmem>>, vector<32x384xbf16>
    %c0_1 = arith.constant 0 : index
    %c0_2 = arith.constant 0 : index
    %1 = vector.load %arg2[%c0_1, %c0_2] : memref<384x512xbf16, #tpu.memory_space<vmem>>, vector<384x512xbf16>
    %cst = arith.constant dense<0.000000e+00> : vector<32x512xf32>
    %2 = tpu.matmul %0, %1, %cst {dimension_numbers = #tpu.dot_dimension_numbers<[1], [0], [0], [1], [0, 0, 1, 1], [], []>} : vector<32x384xbf16>, vector<384x512xbf16>, vector<32x512xf32> -> vector<32x512xf32>
    %c0_3 = arith.constant 0 : index
    %c0_4 = arith.constant 0 : index
    %3 = vector.load %arg3[%c0_3, %c0_4] : memref<1x512xf32, #tpu.memory_space<vmem>>, vector<1x512xf32>
    %4 = vector.broadcast %3 : vector<1x512xf32> to vector<32x512xf32>
    %5 = arith.addf %2, %4 : vector<32x512xf32>
    %cst_5 = arith.constant 0.000000e+00 : f32
    %6 = vector.broadcast %cst_5 : f32 to vector<32x512xf32>
    %7 = arith.maximumf %5, %6 : vector<32x512xf32>
    %8 = arith.truncf %7 : vector<32x512xf32> to vector<32x512xbf16>
    %c0_6 = arith.constant 0 : index
    %c0_7 = arith.constant 0 : index
    %9 = vector.load %arg4[%c0_6, %c0_7] : memref<512x128xbf16, #tpu.memory_space<vmem>>, vector<512x128xbf16>
    %cst_8 = arith.constant dense<0.000000e+00> : vector<32x128xf32>
    %10 = tpu.matmul %8, %9, %cst_8 {dimension_numbers = #tpu.dot_dimension_numbers<[1], [0], [0], [1], [0, 0, 1, 1], [], []>} : vector<32x512xbf16>, vector<512x128xbf16>, vector<32x128xf32> -> vector<32x128xf32>
    %c0_9 = arith.constant 0 : index
    %c0_10 = arith.constant 0 : index
    %11 = vector.load %arg5[%c0_9, %c0_10] : memref<1x128xf32, #tpu.memory_space<vmem>>, vector<1x128xf32>
    %12 = vector.broadcast %11 : vector<1x128xf32> to vector<32x128xf32>
    %13 = arith.addf %10, %12 : vector<32x128xf32>
    %c0_11 = arith.constant 0 : index
    %c0_12 = arith.constant 0 : index
    %14 = vector.load %arg6[%c0_11, %c0_12] : memref<32x128xf32, #tpu.memory_space<vmem>>, vector<32x128xf32>
    tpu.vector_store %arg6[%c0_11, %c0_12], %13 {strides = array<i32>} : memref<32x128xf32, #tpu.memory_space<vmem>>, vector<32x128xf32>,
    return
  }
  func.func @transform_0(%arg0: i32) -> (i32, i32) {
    %c0_i32 = arith.constant 0 : i32
    %c0_i32_0 = arith.constant 0 : i32
    return %arg0, %c0_i32 : i32, i32
  }
  func.func @transform_1(%arg0: i32) -> (i32, i32) {
    %c0_i32 = arith.constant 0 : i32
    %c0_i32_0 = arith.constant 0 : i32
    %c0_i32_1 = arith.constant 0 : i32
    return %c0_i32, %c0_i32_0 : i32, i32
  }
  func.func @transform_2(%arg0: i32) -> (i32, i32) {
    %c0_i32 = arith.constant 0 : i32
    %c0_i32_0 = arith.constant 0 : i32
    %c0_i32_1 = arith.constant 0 : i32
    return %c0_i32, %c0_i32_0 : i32, i32
  }
  func.func @transform_3(%arg0: i32) -> (i32, i32) {
    %c0_i32 = arith.constant 0 : i32
    %c0_i32_0 = arith.constant 0 : i32
    %c0_i32_1 = arith.constant 0 : i32
    return %c0_i32, %c0_i32_0 : i32, i32
  }
  func.func @transform_4(%arg0: i32) -> (i32, i32) {
    %c0_i32 = arith.constant 0 : i32
    %c0_i32_0 = arith.constant 0 : i32
    %c0_i32_1 = arith.constant 0 : i32
    return %c0_i32, %c0_i32_0 : i32, i32
  }
  func.func @transform_5(%arg0: i32) -> (i32, i32) {
    %c0_i32 = arith.constant 0 : i32
    %c0_i32_0 = arith.constant 0 : i32
    return %arg0, %c0_i32 : i32, i32
  }
}

</mosaic_0001>

<llo_original>
// kernel: tile.13
$region0: #{tile.13}
  #allocation0 [shape = 's32[1]{0}', space=sflag, size = 0x4, scoped, tag = 'scoped memory for tile.13']
  %s0 = inlined_call_operand.vmem [shape: f32[32], index: 0, kind: input, shape index: {}]
  %s1 = inlined_call_operand.vmem [shape: f32[16,32], index: 1, kind: output, shape index: {}]
  // Predicated region
  $region2: #{tile.13} parent=0 // pred_check
    _
  $region3: #{tile.13} parent=0 // pred_check_branch
    %3 = sbr.rel (0) target = $region5
  $region4: #{tile.13} parent=0 // pred_region
    _
  $region5: #{tile.13} parent=0 // pred_fallthru
    _
  %v4 = vld [vmem:[%s0] ss:$0 sm:$0xff]
  %5 = vst [vmem:[%s1] sm:$0xff] %v4
  %s6 = scalar_lea.vmem %s1, 8
  %7 = vst [vmem:[%s6] sm:$0xff] %v4

// kernel: tile.18
$region0: #{tile.18}
  %s0 = inlined_call_operand.vmem [shape: f32[16,32], index: 0, kind: input, shape index: {}]
  %s1 = inlined_call_operand.vmem [shape: f32[1,512], index: 1, kind: output, shape index: {}]
  $region1: #{tile.18} parent=0
    #allocation0 [shape = 'u8[16384]{0}', space=vmem, size = 0x4000, scoped, tag = 'scoped mem for output reshape']
    %v2 = vld [vmem:[%s0] ss:$4 sm:$0xf]
    %vm3 = vcmask 261120
    %4 = vst.msk [vmem:[#allocation0] ss:$8 sm:$0xf] %vm3, %v2
    %s5 = scalar_lea.vmem %s0, 3
    %v6 = vld [vmem:[%s5] ss:$4 sm:$0xf]
    %7 = vrot.lane.b32.xlu0 %v6, 96
    %v8 = vpop.permute.xlu0 %7
    %vm9 = vcmask 1048320
    %10 = vst.msk [vmem:[#allocation0] ss:$8 sm:$0xf] %vm9, %v8
    %s11 = scalar_lea.vmem %s0, 2
    %v12 = vld [vmem:[%s11] ss:$4 sm:$0xf]
    %13 = vrot.lane.b32.xlu0 %v12, 64
    %v14 = vpop.permute.xlu0 %13
    %vm15 = vcmask 785920
    %16 = vst.msk [vmem:[#allocation0] ss:$8 sm:$0xf] %vm15, %v14
    %s17 = scalar_lea.vmem %s0, 1
    %v18 = vld [vmem:[%s17] ss:$4 sm:$0xf]
    %19 = vrot.lane.b32.xlu0 %v18, 32
    %v20 = vpop.permute.xlu0 %19
    %vm21 = vcmask 523520
    %22 = vst.msk [vmem:[#allocation0] ss:$8 sm:$0xf] %vm21, %v20
    %s24 = ssub.s32 2, 1
    %v25 = vld [vmem:[#allocation0] sm:%s24]
    %s27 = ssub.s32 2, 1
    %28 = vst [vmem:[%s1] sm:%s27] %v25
    %s29 = scalar_lea.vmem [#allocation0], 8
    %v30 = vld [vmem:[%s29] sm:%s24]
    %s32 = ssub.s32 2, 1
    %s33 = scalar_lea.vmem %s1, 1
    %34 = vst [vmem:[%s33] sm:%s32] %v30
    %s35 = scalar_lea.vmem [#allocation0], 16
    %v36 = vld [vmem:[%s35] sm:%s24]
    %s38 = ssub.s32 2, 1
    %s39 = scalar_lea.vmem %s1, 2
    %40 = vst [vmem:[%s39] sm:%s38] %v36
    %s41 = scalar_lea.vmem [#allocation0], 24
    %v42 = vld [vmem:[%s41] sm:%s24]
    %s44 = ssub.s32 2, 1
    %s45 = scalar_lea.vmem %s1, 3
    %46 = vst [vmem:[%s45] sm:%s44] %v42

// kernel: tile.17
$region0: #{tile.17}
  #allocation0 [shape = 's32[1]{0}', space=sflag, size = 0x4, scoped, tag = 'scoped memory for tile.17']
  %s0 = inlined_call_operand.vmem [shape: f32[8], index: 0, kind: input, shape index: {}]
  %s1 = inlined_call_operand.vmem [shape: f32[16,8], index: 1, kind: output, shape index: {}]
  // Predicated region
  $region2: #{tile.17} parent=0 // pred_check
    _
  $region3: #{tile.17} parent=0 // pred_check_branch
    %3 = sbr.rel (0) target = $region5
  $region4: #{tile.17} parent=0 // pred_region
    _
  $region5: #{tile.17} parent=0 // pred_fallthru
    _
  %v4 = vld [vmem:[%s0] ss:$0 sm:$0xff]
  %5 = vst [vmem:[%s1] sm:$0xff] %v4
  %s6 = scalar_lea.vmem %s1, 8
  %7 = vst [vmem:[%s6] sm:$0xff] %v4

// kernel: tile.19
$region0: #{tile.19}
  %s0 = inlined_call_operand.vmem [shape: f32[16,8], index: 0, kind: input, shape index: {}]
  %s1 = inlined_call_operand.vmem [shape: f32[1,128], index: 1, kind: output, shape index: {}]
  $region1: #{tile.19} parent=0
    #allocation0 [shape = 'u8[4096]{0}', space=vmem, size = 0x1000, scoped, tag = 'scoped mem for output reshape']
    %v2 = vld [vmem:[%s0] sm:$0x1]
    %vm3 = vcmask 64512
    %4 = vst.msk [vmem:[#allocation0] sm:$0x1] %vm3, %v2
    %s5 = scalar_lea.vmem %s0, 15
    %v6 = vld [vmem:[%s5] sm:$0x1]
    %7 = vrot.lane.b32.xlu0 %v6, 120
    %v8 = vpop.permute.xlu0 %7
    %vm9 = vcmask 1048512
    %10 = vst.msk [vmem:[#allocation0] sm:$0x1] %vm9, %v8
    %s11 = scalar_lea.vmem %s0, 14
    %v12 = vld [vmem:[%s11] sm:$0x1]
    %13 = vrot.lane.b32.xlu0 %v12, 112
    %v14 = vpop.permute.xlu0 %13
    %vm15 = vcmask 982912
    %16 = vst.msk [vmem:[#allocation0] sm:$0x1] %vm15, %v14
    %s17 = scalar_lea.vmem %s0, 13
    %v18 = vld [vmem:[%s17] sm:$0x1]
    %19 = vrot.lane.b32.xlu0 %v18, 104
    %v20 = vpop.permute.xlu0 %19
    %vm21 = vcmask 917312
    %22 = vst.msk [vmem:[#allocation0] sm:$0x1] %vm21, %v20
    %s23 = scalar_lea.vmem %s0, 12
    %v24 = vld [vmem:[%s23] sm:$0x1]
    %25 = vrot.lane.b32.xlu0 %v24, 96
    %v26 = vpop.permute.xlu0 %25
    %vm27 = vcmask 851712
    %28 = vst.msk [vmem:[#allocation0] sm:$0x1] %vm27, %v26
    %s29 = scalar_lea.vmem %s0, 11
    %v30 = vld [vmem:[%s29] sm:$0x1]
    %31 = vrot.lane.b32.xlu0 %v30, 88
    %v32 = vpop.permute.xlu0 %31
    %vm33 = vcmask 786112
    %34 = vst.msk [vmem:[#allocation0] sm:$0x1] %vm33, %v32
    %s35 = scalar_lea.vmem %s0, 10
    %v36 = vld [vmem:[%s35] sm:$0x1]
    %37 = vrot.lane.b32.xlu0 %v36, 80
    %v38 = vpop.permute.xlu0 %37
    %vm39 = vcmask 720512
    %40 = vst.msk [vmem:[#allocation0] sm:$0x1] %vm39, %v38
    %s41 = scalar_lea.vmem %s0, 9
    %v42 = vld [vmem:[%s41] sm:$0x1]
    %43 = vrot.lane.b32.xlu0 %v42, 72
    %v44 = vpop.permute.xlu0 %43
    %vm45 = vcmask 654912
    %46 = vst.msk [vmem:[#allocation0] sm:$0x1] %vm45, %v44
    %s47 = scalar_lea.vmem %s0, 8
    %v48 = vld [vmem:[%s47] sm:$0x1]
    %49 = vrot.lane.b32.xlu0 %v48, 64
    %v50 = vpop.permute.xlu0 %49
    %vm51 = vcmask 589312
    %52 = vst.msk [vmem:[#allocation0] sm:$0x1] %vm51, %v50
    %s53 = scalar_lea.vmem %s0, 7
    %v54 = vld [vmem:[%s53] sm:$0x1]
    %55 = vrot.lane.b32.xlu0 %v54, 56
    %v56 = vpop.permute.xlu0 %55
    %vm57 = vcmask 523712
    %58 = vst.msk [vmem:[#allocation0] sm:$0x1] %vm57, %v56
    %s59 = scalar_lea.vmem %s0, 6
    %v60 = vld [vmem:[%s59] sm:$0x1]
    %61 = vrot.lane.b32.xlu0 %v60, 48
    %v62 = vpop.permute.xlu0 %61
    %vm63 = vcmask 458112
    %64 = vst.msk [vmem:[#allocation0] sm:$0x1] %vm63, %v62
    %s65 = scalar_lea.vmem %s0, 5
    %v66 = vld [vmem:[%s65] sm:$0x1]
    %67 = vrot.lane.b32.xlu0 %v66, 40
    %v68 = vpop.permute.xlu0 %67
    %vm69 = vcmask 392512
    %70 = vst.msk [vmem:[#allocation0] sm:$0x1] %vm69, %v68
    %s71 = scalar_lea.vmem %s0, 4
    %v72 = vld [vmem:[%s71] sm:$0x1]
    %73 = vrot.lane.b32.xlu0 %v72, 32
    %v74 = vpop.permute.xlu0 %73
    %vm75 = vcmask 326912
    %76 = vst.msk [vmem:[#allocation0] sm:$0x1] %vm75, %v74
    %s77 = scalar_lea.vmem %s0, 3
    %v78 = vld [vmem:[%s77] sm:$0x1]
    %79 = vrot.lane.b32.xlu0 %v78, 24
    %v80 = vpop.permute.xlu0 %79
    %vm81 = vcmask 261312
    %82 = vst.msk [vmem:[#allocation0] sm:$0x1] %vm81, %v80
    %s83 = scalar_lea.vmem %s0, 2
    %v84 = vld [vmem:[%s83] sm:$0x1]
    %85 = vrot.lane.b32.xlu0 %v84, 16
    %v86 = vpop.permute.xlu0 %85
    %vm87 = vcmask 195712
    %88 = vst.msk [vmem:[#allocation0] sm:$0x1] %vm87, %v86
    %s89 = scalar_lea.vmem %s0, 1
    %v90 = vld [vmem:[%s89] sm:$0x1]
    %91 = vrot.lane.b32.xlu0 %v90, 8
    %v92 = vpop.permute.xlu0 %91
    %vm93 = vcmask 130112
    %94 = vst.msk [vmem:[#allocation0] sm:$0x1] %vm93, %v92
    %s96 = ssub.s32 2, 1
    %v97 = vld [vmem:[#allocation0] sm:%s96]
    %s99 = ssub.s32 2, 1
    %100 = vst [vmem:[%s1] sm:%s99] %v97

// kernel: conv1d_linear.1
$region0: #{conv1d_linear.1}
  #allocation0 [shape = 'u32[]', space=smem, size = 0x4, offset = 0x4, fixed_abs, tag = 'smem constant byte address 0x4 - core index']
  #allocation1 [shape = 'u32[72,128]{1,0:T(1,128)}', space=vmem, size = 0x9000, scoped, tag = 'internal scratch']
  %s0 = inlined_call_operand.vmem [shape: bf16[256,384], index: 0, kind: input, shape index: {}]
  %s1 = inlined_call_operand.vmem [shape: bf16[384,512], index: 1, kind: input, shape index: {}]
  %s2 = inlined_call_operand.vmem [shape: f32[1,512], index: 2, kind: input, shape index: {}]
  %s3 = inlined_call_operand.vmem [shape: bf16[512,128], index: 3, kind: input, shape index: {}]
  %s4 = inlined_call_operand.vmem [shape: f32[1,128], index: 4, kind: input, shape index: {}]
  %s5 = inlined_call_operand.vmem [shape: f32[256,128], index: 5, kind: output, shape index: {}]
  %s6 = sld [smem:[#allocation0]]
  $region53: #{conv1d_linear.1} parent=0
    _
  %s8 = ssub.s32 1, %s6
  %s9 = scalar_select 0, %s8, %s6
  loop: start=0, step=1, limit=10
  $region2: #{conv1d_linear.1} parent=0 // loop_pre_header
    _
  $region3: #{conv1d_linear.1} parent=0 // loop_header
    %s11 = sphi 0, %s15
    %p12 = scmp.ge.s32.totalorder %s11, 10
    %s21 = sphi 0, %s23
    %s24 = sphi 0, %s21
    %s25 = sphi 0, %s24
    %s41 = sphi 0, %s25
    %s45 = sphi 0, %s45
    %s47 = sphi 0, %s45
    %s48 = sphi 0, %s47
    %s62 = sphi 0, %s48
    %s66 = sphi 0, %s66
    %s68 = sphi 0, %s66
    %s69 = sphi 0, %s68
    %s83 = sphi 0, %s69
    %s87 = sphi 0, %s87
    %s89 = sphi 0, %s87
    %s90 = sphi 0, %s89
    %s104 = sphi 0, %s90
    %s108 = sphi 0, %s108
    %s110 = sphi 0, %s108
    %s111 = sphi 0, %s110
    %s125 = sphi 0, %s111
    %s131 = sphi 0, %s133
    %s134 = sphi 0, %s131
    %s135 = sphi 0, %s134
    %s151 = sphi 0, %s135
  $region4: #{conv1d_linear.1} parent=0 // loop_header_branch
    %14 = sbr.rel (%p12) target = $region8
  $region5: #{conv1d_linear.1} parent=0 // loop_body
    %s16 = ssub.s32 %s11, 1
    %s17 = ssub.s32 %s11, 2
    %s18 = sadd.s32 %s11, 1
    %s19 = ssub.s32 %s11, %s18
    %p20 = scmp.eq.s32.totalorder %s19, 0
    %s22 = sadd.s32 %s21, 1
    %s23 = scalar_select %p20, %s21, %s22
    %p26 = pneg %p20
    %p27 = scmp.eq.s32.totalorder %s11, 7
    %p28 = por %p26, %p27
    %p29 = scmp.ne.s32.totalorder %s21, %s24
    %p30 = scmp.eq.s32.totalorder %s11, 0
    %p31 = por %p29, %p30
    %p32 = scmp.ne.s32.totalorder %s21, %s24
    %p33 = scmp.eq.s32.totalorder %s16, 7
    %p34 = por %p32, %p33
    %p35 = scmp.ne.s32.totalorder %s24, %s25
    %p36 = scmp.eq.s32.totalorder %s16, 0
    %p37 = por %p35, %p36
    %p38 = scmp.ne.s32.totalorder %s24, %s25
    %p39 = scmp.eq.s32.totalorder %s17, 7
    %p40 = por %p38, %p39
    %p42 = scmp.ne.s32.totalorder %s25, %s41
    %p43 = scmp.eq.s32.totalorder %s17, 0
    %p44 = por %p42, %p43
    %s46 = sadd.s32 %s45, 1
    %p49 = scmp.eq.s32.totalorder %s11, 7
    %p50 = scmp.ne.s32.totalorder %s45, %s47
    %p51 = scmp.eq.s32.totalorder %s11, 0
    %p52 = por %p50, %p51
    %p53 = scmp.ne.s32.totalorder %s45, %s47
    %p54 = scmp.eq.s32.totalorder %s16, 7
    %p55 = por %p53, %p54
    %p56 = scmp.ne.s32.totalorder %s47, %s48
    %p57 = scmp.eq.s32.totalorder %s16, 0
    %p58 = por %p56, %p57
    %p59 = scmp.ne.s32.totalorder %s47, %s48
    %p60 = scmp.eq.s32.totalorder %s17, 7
    %p61 = por %p59, %p60
    %p63 = scmp.ne.s32.totalorder %s48, %s62
    %p64 = scmp.eq.s32.totalorder %s17, 0
    %p65 = por %p63, %p64
    %s67 = sadd.s32 %s66, 1
    %p70 = scmp.eq.s32.totalorder %s11, 7
    %p71 = scmp.ne.s32.totalorder %s66, %s68
    %p72 = scmp.eq.s32.totalorder %s11, 0
    %p73 = por %p71, %p72
    %p74 = scmp.ne.s32.totalorder %s66, %s68
    %p75 = scmp.eq.s32.totalorder %s16, 7
    %p76 = por %p74, %p75
    %p77 = scmp.ne.s32.totalorder %s68, %s69
    %p78 = scmp.eq.s32.totalorder %s16, 0
    %p79 = por %p77, %p78
    %p80 = scmp.ne.s32.totalorder %s68, %s69
    %p81 = scmp.eq.s32.totalorder %s17, 7
    %p82 = por %p80, %p81
    %p84 = scmp.ne.s32.totalorder %s69, %s83
    %p85 = scmp.eq.s32.totalorder %s17, 0
    %p86 = por %p84, %p85
    %s88 = sadd.s32 %s87, 1
    %p91 = scmp.eq.s32.totalorder %s11, 7
    %p92 = scmp.ne.s32.totalorder %s87, %s89
    %p93 = scmp.eq.s32.totalorder %s11, 0
    %p94 = por %p92, %p93
    %p95 = scmp.ne.s32.totalorder %s87, %s89
    %p96 = scmp.eq.s32.totalorder %s16, 7
    %p97 = por %p95, %p96
    %p98 = scmp.ne.s32.totalorder %s89, %s90
    %p99 = scmp.eq.s32.totalorder %s16, 0
    %p100 = por %p98, %p99
    %p101 = scmp.ne.s32.totalorder %s89, %s90
    %p102 = scmp.eq.s32.totalorder %s17, 7
    %p103 = por %p101, %p102
    %p105 = scmp.ne.s32.totalorder %s90, %s104
    %p106 = scmp.eq.s32.totalorder %s17, 0
    %p107 = por %p105, %p106
    %s109 = sadd.s32 %s108, 1
    %p112 = scmp.eq.s32.totalorder %s11, 7
    %p113 = scmp.ne.s32.totalorder %s108, %s110
    %p114 = scmp.eq.s32.totalorder %s11, 0
    %p115 = por %p113, %p114
    %p116 = scmp.ne.s32.totalorder %s108, %s110
    %p117 = scmp.eq.s32.totalorder %s16, 7
    %p118 = por %p116, %p117
    %p119 = scmp.ne.s32.totalorder %s110, %s111
    %p120 = scmp.eq.s32.totalorder %s16, 0
    %p121 = por %p119, %p120
    %p122 = scmp.ne.s32.totalorder %s110, %s111
    %p123 = scmp.eq.s32.totalorder %s17, 7
    %p124 = por %p122, %p123
    %p126 = scmp.ne.s32.totalorder %s111, %s125
    %p127 = scmp.eq.s32.totalorder %s17, 0
    %p128 = por %p126, %p127
    %s129 = ssub.s32 %s11, %s18
    %p130 = scmp.eq.s32.totalorder %s129, 0
    %s132 = sadd.s32 %s131, 1
    %s133 = scalar_select %p130, %s131, %s132
    %p136 = pneg %p130
    %p137 = scmp.eq.s32.totalorder %s11, 7
    %p138 = por %p136, %p137
    %p139 = scmp.ne.s32.totalorder %s131, %s134
    %p140 = scmp.eq.s32.totalorder %s11, 0
    %p141 = por %p139, %p140
    %p142 = scmp.ne.s32.totalorder %s131, %s134
    %p143 = scmp.eq.s32.totalorder %s16, 7
    %p144 = por %p142, %p143
    %p145 = scmp.ne.s32.totalorder %s134, %s135
    %p146 = scmp.eq.s32.totalorder %s16, 0
    %p147 = por %p145, %p146
    %p148 = scmp.ne.s32.totalorder %s134, %s135
    %p149 = scmp.eq.s32.totalorder %s17, 7
    %p150 = por %p148, %p149
    %p152 = scmp.ne.s32.totalorder %s135, %s151
    %p153 = scmp.eq.s32.totalorder %s17, 0
    %p154 = por %p152, %p153
    %p155 = scmp.le.s32.totalorder 1, %s11
    %p156 = scmp.lt.s32.totalorder %s11, 9
    %p157 = pnand %p155, %p156
    %p158 = pneg %p157
    // Predicated region
    $region9: #{conv1d_linear.1} parent=5 // pred_check
      _
    $region10: #{conv1d_linear.1} parent=5 // pred_check_branch
      %160 = sbr.rel (%p157) target = $region12
    $region11: #{conv1d_linear.1} parent=5 // pred_region
      %s161 = ssub.s32 %s11, 1
      // Predicated region
      $region13: #{conv1d_linear.1} parent=11 // pred_check
        %p162 = pneg %p58
      $region14: #{conv1d_linear.1} parent=11 // pred_check_branch
        %164 = sbr.rel (%p162) target = $region16
      $region15: #{conv1d_linear.1} parent=11 // pred_region
        _
      $region16: #{conv1d_linear.1} parent=11 // pred_fallthru
        _
      // Predicated region
      $region17: #{conv1d_linear.1} parent=11 // pred_check
        %p165 = pneg %p79
      $region18: #{conv1d_linear.1} parent=11 // pred_check_branch
        %167 = sbr.rel (%p165) target = $region20
      $region19: #{conv1d_linear.1} parent=11 // pred_region
        _
      $region20: #{conv1d_linear.1} parent=11 // pred_fallthru
        _
      // Predicated region
      $region21: #{conv1d_linear.1} parent=11 // pred_check
        %p168 = pneg %p100
      $region22: #{conv1d_linear.1} parent=11 // pred_check_branch
        %170 = sbr.rel (%p168) target = $region24
      $region23: #{conv1d_linear.1} parent=11 // pred_region
        _
      $region24: #{conv1d_linear.1} parent=11 // pred_fallthru
        _
      // Predicated region
      $region25: #{conv1d_linear.1} parent=11 // pred_check
        %p171 = pneg %p121
      $region26: #{conv1d_linear.1} parent=11 // pred_check_branch
        %173 = sbr.rel (%p171) target = $region28
      $region27: #{conv1d_linear.1} parent=11 // pred_region
        _
      $region28: #{conv1d_linear.1} parent=11 // pred_fallthru
        _
    $region12: #{conv1d_linear.1} parent=5 // pred_fallthru
      _
    %p174 = scmp.lt.s32.totalorder %s11, 8
    // Predicated region
    $region29: #{conv1d_linear.1} parent=5 // pred_check
      %p175 = pneg %p174
    $region30: #{conv1d_linear.1} parent=5 // pred_check_branch
      %177 = sbr.rel (%p175) target = $region32
    $region31: #{conv1d_linear.1} parent=5 // pred_region
      // Predicated region
      $region33: #{conv1d_linear.1} parent=31 // pred_check
        %p178 = pneg %p31
      $region34: #{conv1d_linear.1} parent=31 // pred_check_branch
        %180 = sbr.rel (%p178) target = $region36
      $region35: #{conv1d_linear.1} parent=31 // pred_region
        %s181 = smul.u32 4, %s11
        %p182 = scmp.lt.s32.totalorder %s181, 31
        %s183 = scalar_select %p182, %s181, 31
        %s184 = smul.addr %s183, 3
        %s185 = smul.addr %s184, 4
        %s186 = scalar_lea.vmem %s0, %s185
        %s187 = smul.u32 4, %s11
      $region36: #{conv1d_linear.1} parent=31 // pred_fallthru
        _
    $region32: #{conv1d_linear.1} parent=5 // pred_fallthru
      _
    %p188 = scmp.le.s32.totalorder 1, %s11
    %p189 = scmp.lt.s32.totalorder %s11, 9
    %p190 = pnand %p188, %p189
    %p191 = pneg %p190
    // Predicated region
    $region37: #{conv1d_linear.1} parent=5 // pred_check
      _
    $region38: #{conv1d_linear.1} parent=5 // pred_check_branch
      %193 = sbr.rel (%p190) target = $region40
    $region39: #{conv1d_linear.1} parent=5 // pred_region
      %s194 = ssub.s32 %s11, 1
      %s195 = smul.u32 4, %s16
      %p196 = scmp.lt.s32.totalorder %s195, 31
      %s197 = scalar_select %p196, %s195, 31
      %s198 = smul.addr %s197, 3
      %s199 = smul.addr %s198, 4
      %s200 = scalar_lea.vmem %s0, %s199
      %p201 = pneg %p37
      %p202 = pneg %p34
      %p203 = pneg %p58
      %p204 = pneg %p55
      %p205 = pneg %p79
      %p206 = pneg %p76
      %p207 = pneg %p100
      %p208 = pneg %p97
      %p209 = pneg %p121
      %p210 = pneg %p118
      %p211 = pneg %p147
      %p212 = pneg %p144
      %s213 = smul.u32 4, %s16
      %p214 = scmp.lt.s32.totalorder %s213, 31
      %s215 = scalar_select %p214, %s213, 31
      %s216 = smul.addr %s215, 8
      %s217 = scalar_lea.vmem %s5, %s216
      %s218 = smul.u32 4, %s16
      %p219 = scmp.lt.s32.totalorder %s218, 31
      %s220 = scalar_select %p219, %s218, 31
      %s221 = smul.addr %s220, 3
      %s222 = smul.addr %s221, 4
      %s223 = scalar_lea.vmem %s0, %s222
      %s224 = smul.u32 4, %s16
      %s225 = smul.u32 4, %s16
      %p226 = scmp.lt.s32.totalorder %s225, 31
      %s227 = scalar_select %p226, %s225, 31
      %s228 = smul.addr %s227, 8
      %s229 = scalar_lea.vmem %s5, %s228
      %s230 = smul.u32 4, %s16
      %v231 = vld [vmem:[%s223] sm:$0xff]
      %v232 = vld [vmem:[%s223 + $0x8] sm:$0xf]
      %v233 = vld [vmem:[%s223 + $0xc] sm:$0xff]
      %v234 = vld [vmem:[%s223 + $0x14] sm:$0xf]
      %v235 = vld [vmem:[%s223 + $0x18] sm:$0xff]
      %v236 = vld [vmem:[%s223 + $0x20] sm:$0xf]
      %v237 = vld [vmem:[%s223 + $0x24] sm:$0xff]
      %v238 = vld [vmem:[%s223 + $0x2c] sm:$0xf]
      %v239 = vld [vmem:[%s1] sm:$0xff]
      %v240 = vld [vmem:[%s1 + $0x8] sm:$0xff]
      %v241 = vld [vmem:[%s1 + $0x10] sm:$0xff]
      %v242 = vld [vmem:[%s1 + $0x18] sm:$0xff]
      %v243 = vld [vmem:[%s1 + $0x20] sm:$0xff]
      %v244 = vld [vmem:[%s1 + $0x28] sm:$0xff]
      %v245 = vld [vmem:[%s1 + $0x30] sm:$0xff]
      %v246 = vld [vmem:[%s1 + $0x38] sm:$0xff]
      %v247 = vld [vmem:[%s1 + $0x40] sm:$0xff]
      %v248 = vld [vmem:[%s1 + $0x48] sm:$0xff]
      %v249 = vld [vmem:[%s1 + $0x50] sm:$0xff]
      %v250 = vld [vmem:[%s1 + $0x58] sm:$0xff]
      %v251 = vld [vmem:[%s1 + $0x60] sm:$0xff]
      %v252 = vld [vmem:[%s1 + $0x68] sm:$0xff]
      %v253 = vld [vmem:[%s1 + $0x70] sm:$0xff]
      %v254 = vld [vmem:[%s1 + $0x78] sm:$0xff]
      %v255 = vld [vmem:[%s1 + $0x80] sm:$0xff]
      %v256 = vld [vmem:[%s1 + $0x88] sm:$0xff]
      %v257 = vld [vmem:[%s1 + $0x90] sm:$0xff]
      %v258 = vld [vmem:[%s1 + $0x98] sm:$0xff]
      %v259 = vld [vmem:[%s1 + $0xa0] sm:$0xff]
      %v260 = vld [vmem:[%s1 + $0xa8] sm:$0xff]
      %v261 = vld [vmem:[%s1 + $0xb0] sm:$0xff]
      %v262 = vld [vmem:[%s1 + $0xb8] sm:$0xff]
      %v263 = vld [vmem:[%s1 + $0xc0] sm:$0xff]
      %v264 = vld [vmem:[%s1 + $0xc8] sm:$0xff]
      %v265 = vld [vmem:[%s1 + $0xd0] sm:$0xff]
      %v266 = vld [vmem:[%s1 + $0xd8] sm:$0xff]
      %v267 = vld [vmem:[%s1 + $0xe0] sm:$0xff]
      %v268 = vld [vmem:[%s1 + $0xe8] sm:$0xff]
      %v269 = vld [vmem:[%s1 + $0xf0] sm:$0xff]
      %v270 = vld [vmem:[%s1 + $0xf8] sm:$0xff]
      %v271 = vld [vmem:[%s1 + $0x100] sm:$0xff]
      %v272 = vld [vmem:[%s1 + $0x108] sm:$0xff]
      %v273 = vld [vmem:[%s1 + $0x110] sm:$0xff]
      %v274 = vld [vmem:[%s1 + $0x118] sm:$0xff]
      %v275 = vld [vmem:[%s1 + $0x120] sm:$0xff]
      %v276 = vld [vmem:[%s1 + $0x128] sm:$0xff]
      %v277 = vld [vmem:[%s1 + $0x130] sm:$0xff]
      %v278 = vld [vmem:[%s1 + $0x138] sm:$0xff]
      %v279 = vld [vmem:[%s1 + $0x140] sm:$0xff]
      %v280 = vld [vmem:[%s1 + $0x148] sm:$0xff]
      %v281 = vld [vmem:[%s1 + $0x150] sm:$0xff]
      %v282 = vld [vmem:[%s1 + $0x158] sm:$0xff]
      %v283 = vld [vmem:[%s1 + $0x160] sm:$0xff]
      %v284 = vld [vmem:[%s1 + $0x168] sm:$0xff]
      %v285 = vld [vmem:[%s1 + $0x170] sm:$0xff]
      %v286 = vld [vmem:[%s1 + $0x178] sm:$0xff]
      %v287 = vld [vmem:[%s1 + $0x180] sm:$0xff]
      %v288 = vld [vmem:[%s1 + $0x188] sm:$0xff]
      %v289 = vld [vmem:[%s1 + $0x190] sm:$0xff]
      %v290 = vld [vmem:[%s1 + $0x198] sm:$0xff]
      %v291 = vld [vmem:[%s1 + $0x1a0] sm:$0xff]
      %v292 = vld [vmem:[%s1 + $0x1a8] sm:$0xff]
      %v293 = vld [vmem:[%s1 + $0x1b0] sm:$0xff]
      %v294 = vld [vmem:[%s1 + $0x1b8] sm:$0xff]
      %v295 = vld [vmem:[%s1 + $0x1c0] sm:$0xff]
      %v296 = vld [vmem:[%s1 + $0x1c8] sm:$0xff]
      %v297 = vld [vmem:[%s1 + $0x1d0] sm:$0xff]
      %v298 = vld [vmem:[%s1 + $0x1d8] sm:$0xff]
      %v299 = vld [vmem:[%s1 + $0x1e0] sm:$0xff]
      %v300 = vld [vmem:[%s1 + $0x1e8] sm:$0xff]
      %v301 = vld [vmem:[%s1 + $0x1f0] sm:$0xff]
      %v302 = vld [vmem:[%s1 + $0x1f8] sm:$0xff]
      %v303 = vld [vmem:[%s1 + $0x200] sm:$0xff]
      %v304 = vld [vmem:[%s1 + $0x208] sm:$0xff]
      %v305 = vld [vmem:[%s1 + $0x210] sm:$0xff]
      %v306 = vld [vmem:[%s1 + $0x218] sm:$0xff]
      %v307 = vld [vmem:[%s1 + $0x220] sm:$0xff]
      %v308 = vld [vmem:[%s1 + $0x228] sm:$0xff]
      %v309 = vld [vmem:[%s1 + $0x230] sm:$0xff]
      %v310 = vld [vmem:[%s1 + $0x238] sm:$0xff]
      %v311 = vld [vmem:[%s1 + $0x240] sm:$0xff]
      %v312 = vld [vmem:[%s1 + $0x248] sm:$0xff]
      %v313 = vld [vmem:[%s1 + $0x250] sm:$0xff]
      %v314 = vld [vmem:[%s1 + $0x258] sm:$0xff]
      %v315 = vld [vmem:[%s1 + $0x260] sm:$0xff]
      %v316 = vld [vmem:[%s1 + $0x268] sm:$0xff]
      %v317 = vld [vmem:[%s1 + $0x270] sm:$0xff]
      %v318 = vld [vmem:[%s1 + $0x278] sm:$0xff]
      %v319 = vld [vmem:[%s1 + $0x280] sm:$0xff]
      %v320 = vld [vmem:[%s1 + $0x288] sm:$0xff]
      %v321 = vld [vmem:[%s1 + $0x290] sm:$0xff]
      %v322 = vld [vmem:[%s1 + $0x298] sm:$0xff]
      %v323 = vld [vmem:[%s1 + $0x2a0] sm:$0xff]
      %v324 = vld [vmem:[%s1 + $0x2a8] sm:$0xff]
      %v325 = vld [vmem:[%s1 + $0x2b0] sm:$0xff]
      %v326 = vld [vmem:[%s1 + $0x2b8] sm:$0xff]
      %v327 = vld [vmem:[%s1 + $0x2c0] sm:$0xff]
      %v328 = vld [vmem:[%s1 + $0x2c8] sm:$0xff]
      %v329 = vld [vmem:[%s1 + $0x2d0] sm:$0xff]
      %v330 = vld [vmem:[%s1 + $0x2d8] sm:$0xff]
      %v331 = vld [vmem:[%s1 + $0x2e0] sm:$0xff]
      %v332 = vld [vmem:[%s1 + $0x2e8] sm:$0xff]
      %v333 = vld [vmem:[%s1 + $0x2f0] sm:$0xff]
      %v334 = vld [vmem:[%s1 + $0x2f8] sm:$0xff]
      %v335 = vld [vmem:[%s2] sm:$0xf]
      %v337 = vperm.slane %v335, 0
      %v338 = vperm.slane %v335, 1
      %v339 = vperm.slane %v335, 2
      %v340 = vperm.slane %v335, 3
      %v353 = vunpack.c.l.b16 %v231
      %v354 = vunpack.c.h.b16 %v231
      %v355 = vunpack.c.l.b16 %v232
      %v356 = vunpack.c.l.b16 %v233
      %v357 = vunpack.c.h.b16 %v233
      %v358 = vunpack.c.l.b16 %v234
      %v359 = vunpack.c.l.b16 %v235
      %v360 = vunpack.c.h.b16 %v235
      %v361 = vunpack.c.l.b16 %v236
      %v362 = vunpack.c.l.b16 %v237
      %v363 = vunpack.c.h.b16 %v237
      %v364 = vunpack.c.l.b16 %v238
      %v365 = vpack.c.b16 %v356, %v353
      %v366 = vpack.c.b16 %v357, %v354
      %v367 = vpack.c.b16 %v358, %v355
      %v368 = vpack.c.b16 %v362, %v359
      %v369 = vpack.c.b16 %v363, %v360
      %v370 = vpack.c.b16 %v364, %v361
      %v473 = vunpack.c.l.b16 %v239
      %v474 = vunpack.c.h.b16 %v239
      %v475 = vunpack.c.l.b16 %v240
      %v476 = vunpack.c.h.b16 %v240
      %v477 = vunpack.c.l.b16 %v241
      %v478 = vunpack.c.h.b16 %v241
      %v479 = vunpack.c.l.b16 %v242
      %v480 = vunpack.c.h.b16 %v242
      %v481 = vunpack.c.l.b16 %v243
      %v482 = vunpack.c.h.b16 %v243
      %v483 = vunpack.c.l.b16 %v244
      %v484 = vunpack.c.h.b16 %v244
      %v485 = vunpack.c.l.b16 %v245
      %v486 = vunpack.c.h.b16 %v245
      %v487 = vunpack.c.l.b16 %v246
      %v488 = vunpack.c.h.b16 %v246
      %v489 = vunpack.c.l.b16 %v247
      %v490 = vunpack.c.h.b16 %v247
      %v491 = vunpack.c.l.b16 %v248
      %v492 = vunpack.c.h.b16 %v248
      %v493 = vunpack.c.l.b16 %v249
      %v494 = vunpack.c.h.b16 %v249
      %v495 = vunpack.c.l.b16 %v250
      %v496 = vunpack.c.h.b16 %v250
      %v497 = vunpack.c.l.b16 %v251
      %v498 = vunpack.c.h.b16 %v251
      %v499 = vunpack.c.l.b16 %v252
      %v500 = vunpack.c.h.b16 %v252
      %v501 = vunpack.c.l.b16 %v253
      %v502 = vunpack.c.h.b16 %v253
      %v503 = vunpack.c.l.b16 %v254
      %v504 = vunpack.c.h.b16 %v254
      %v505 = vunpack.c.l.b16 %v255
      %v506 = vunpack.c.h.b16 %v255
      %v507 = vunpack.c.l.b16 %v256
      %v508 = vunpack.c.h.b16 %v256
      %v509 = vunpack.c.l.b16 %v257
      %v510 = vunpack.c.h.b16 %v257
      %v511 = vunpack.c.l.b16 %v258
      %v512 = vunpack.c.h.b16 %v258
      %v513 = vunpack.c.l.b16 %v259
      %v514 = vunpack.c.h.b16 %v259
      %v515 = vunpack.c.l.b16 %v260
      %v516 = vunpack.c.h.b16 %v260
      %v517 = vunpack.c.l.b16 %v261
      %v518 = vunpack.c.h.b16 %v261
      %v519 = vunpack.c.l.b16 %v262
      %v520 = vunpack.c.h.b16 %v262
      %v521 = vunpack.c.l.b16 %v263
      %v522 = vunpack.c.h.b16 %v263
      %v523 = vunpack.c.l.b16 %v264
      %v524 = vunpack.c.h.b16 %v264
      %v525 = vunpack.c.l.b16 %v265
      %v526 = vunpack.c.h.b16 %v265
      %v527 = vunpack.c.l.b16 %v266
      %v528 = vunpack.c.h.b16 %v266
      %v529 = vunpack.c.l.b16 %v267
      %v530 = vunpack.c.h.b16 %v267
      %v531 = vunpack.c.l.b16 %v268
      %v532 = vunpack.c.h.b16 %v268
      %v533 = vunpack.c.l.b16 %v269
      %v534 = vunpack.c.h.b16 %v269
      %v535 = vunpack.c.l.b16 %v270
      %v536 = vunpack.c.h.b16 %v270
      %v537 = vunpack.c.l.b16 %v271
      %v538 = vunpack.c.h.b16 %v271
      %v539 = vunpack.c.l.b16 %v272
      %v540 = vunpack.c.h.b16 %v272
      %v541 = vunpack.c.l.b16 %v273
      %v542 = vunpack.c.h.b16 %v273
      %v543 = vunpack.c.l.b16 %v274
      %v544 = vunpack.c.h.b16 %v274
      %v545 = vunpack.c.l.b16 %v275
      %v546 = vunpack.c.h.b16 %v275
      %v547 = vunpack.c.l.b16 %v276
      %v548 = vunpack.c.h.b16 %v276
      %v549 = vunpack.c.l.b16 %v277
      %v550 = vunpack.c.h.b16 %v277
      %v551 = vunpack.c.l.b16 %v278
      %v552 = vunpack.c.h.b16 %v278
      %v553 = vunpack.c.l.b16 %v279
      %v554 = vunpack.c.h.b16 %v279
      %v555 = vunpack.c.l.b16 %v280
      %v556 = vunpack.c.h.b16 %v280
      %v557 = vunpack.c.l.b16 %v281
      %v558 = vunpack.c.h.b16 %v281
      %v559 = vunpack.c.l.b16 %v282
      %v560 = vunpack.c.h.b16 %v282
      %v561 = vunpack.c.l.b16 %v283
      %v562 = vunpack.c.h.b16 %v283
      %v563 = vunpack.c.l.b16 %v284
      %v564 = vunpack.c.h.b16 %v284
      %v565 = vunpack.c.l.b16 %v285
      %v566 = vunpack.c.h.b16 %v285
      %v567 = vunpack.c.l.b16 %v286
      %v568 = vunpack.c.h.b16 %v286
      %v569 = vunpack.c.l.b16 %v287
      %v570 = vunpack.c.h.b16 %v287
      %v571 = vunpack.c.l.b16 %v288
      %v572 = vunpack.c.h.b16 %v288
      %v573 = vunpack.c.l.b16 %v289
      %v574 = vunpack.c.h.b16 %v289
      %v575 = vunpack.c.l.b16 %v290
      %v576 = vunpack.c.h.b16 %v290
      %v577 = vunpack.c.l.b16 %v291
      %v578 = vunpack.c.h.b16 %v291
      %v579 = vunpack.c.l.b16 %v292
      %v580 = vunpack.c.h.b16 %v292
      %v581 = vunpack.c.l.b16 %v293
      %v582 = vunpack.c.h.b16 %v293
      %v583 = vunpack.c.l.b16 %v294
      %v584 = vunpack.c.h.b16 %v294
      %v585 = vunpack.c.l.b16 %v295
      %v586 = vunpack.c.h.b16 %v295
      %v587 = vunpack.c.l.b16 %v296
      %v588 = vunpack.c.h.b16 %v296
      %v589 = vunpack.c.l.b16 %v297
      %v590 = vunpack.c.h.b16 %v297
      %v591 = vunpack.c.l.b16 %v298
      %v592 = vunpack.c.h.b16 %v298
      %v593 = vunpack.c.l.b16 %v299
      %v594 = vunpack.c.h.b16 %v299
      %v595 = vunpack.c.l.b16 %v300
      %v596 = vunpack.c.h.b16 %v300
      %v597 = vunpack.c.l.b16 %v301
      %v598 = vunpack.c.h.b16 %v301
      %v599 = vunpack.c.l.b16 %v302
      %v600 = vunpack.c.h.b16 %v302
      %v601 = vunpack.c.l.b16 %v303
      %v602 = vunpack.c.h.b16 %v303
      %v603 = vunpack.c.l.b16 %v304
      %v604 = vunpack.c.h.b16 %v304
      %v605 = vunpack.c.l.b16 %v305
      %v606 = vunpack.c.h.b16 %v305
      %v607 = vunpack.c.l.b16 %v306
      %v608 = vunpack.c.h.b16 %v306
      %v609 = vunpack.c.l.b16 %v307
      %v610 = vunpack.c.h.b16 %v307
      %v611 = vunpack.c.l.b16 %v308
      %v612 = vunpack.c.h.b16 %v308
      %v613 = vunpack.c.l.b16 %v309
      %v614 = vunpack.c.h.b16 %v309
      %v615 = vunpack.c.l.b16 %v310
      %v616 = vunpack.c.h.b16 %v310
      %v617 = vunpack.c.l.b16 %v311
      %v618 = vunpack.c.h.b16 %v311
      %v619 = vunpack.c.l.b16 %v312
      %v620 = vunpack.c.h.b16 %v312
      %v621 = vunpack.c.l.b16 %v313
      %v622 = vunpack.c.h.b16 %v313
      %v623 = vunpack.c.l.b16 %v314
      %v624 = vunpack.c.h.b16 %v314
      %v625 = vunpack.c.l.b16 %v315
      %v626 = vunpack.c.h.b16 %v315
      %v627 = vunpack.c.l.b16 %v316
      %v628 = vunpack.c.h.b16 %v316
      %v629 = vunpack.c.l.b16 %v317
      %v630 = vunpack.c.h.b16 %v317
      %v631 = vunpack.c.l.b16 %v318
      %v632 = vunpack.c.h.b16 %v318
      %v633 = vunpack.c.l.b16 %v319
      %v634 = vunpack.c.h.b16 %v319
      %v635 = vunpack.c.l.b16 %v320
      %v636 = vunpack.c.h.b16 %v320
      %v637 = vunpack.c.l.b16 %v321
      %v638 = vunpack.c.h.b16 %v321
      %v639 = vunpack.c.l.b16 %v322
      %v640 = vunpack.c.h.b16 %v322
      %v641 = vunpack.c.l.b16 %v323
      %v642 = vunpack.c.h.b16 %v323
      %v643 = vunpack.c.l.b16 %v324
      %v644 = vunpack.c.h.b16 %v324
      %v645 = vunpack.c.l.b16 %v325
      %v646 = vunpack.c.h.b16 %v325
      %v647 = vunpack.c.l.b16 %v326
      %v648 = vunpack.c.h.b16 %v326
      %v649 = vunpack.c.l.b16 %v327
      %v650 = vunpack.c.h.b16 %v327
      %v651 = vunpack.c.l.b16 %v328
      %v652 = vunpack.c.h.b16 %v328
      %v653 = vunpack.c.l.b16 %v329
      %v654 = vunpack.c.h.b16 %v329
      %v655 = vunpack.c.l.b16 %v330
      %v656 = vunpack.c.h.b16 %v330
      %v657 = vunpack.c.l.b16 %v331
      %v658 = vunpack.c.h.b16 %v331
      %v659 = vunpack.c.l.b16 %v332
      %v660 = vunpack.c.h.b16 %v332
      %v661 = vunpack.c.l.b16 %v333
      %v662 = vunpack.c.h.b16 %v333
      %v663 = vunpack.c.l.b16 %v334
      %v664 = vunpack.c.h.b16 %v334
      %v665 = vpack.c.b16 %v477, %v473
      %v666 = vpack.c.b16 %v478, %v474
      %v667 = vpack.c.b16 %v479, %v475
      %v668 = vpack.c.b16 %v480, %v476
      %v669 = vpack.c.b16 %v485, %v481
      %v670 = vpack.c.b16 %v486, %v482
      %v671 = vpack.c.b16 %v487, %v483
      %v672 = vpack.c.b16 %v488, %v484
      %v673 = vpack.c.b16 %v493, %v489
      %v674 = vpack.c.b16 %v494, %v490
      %v675 = vpack.c.b16 %v495, %v491
      %v676 = vpack.c.b16 %v496, %v492
      %v677 = vpack.c.b16 %v501, %v497
      %v678 = vpack.c.b16 %v502, %v498
      %v679 = vpack.c.b16 %v503, %v499
      %v680 = vpack.c.b16 %v504, %v500
      %v681 = vpack.c.b16 %v509, %v505
      %v682 = vpack.c.b16 %v510, %v506
      %v683 = vpack.c.b16 %v511, %v507
      %v684 = vpack.c.b16 %v512, %v508
      %v685 = vpack.c.b16 %v517, %v513
      %v686 = vpack.c.b16 %v518, %v514
      %v687 = vpack.c.b16 %v519, %v515
      %v688 = vpack.c.b16 %v520, %v516
      %v689 = vpack.c.b16 %v525, %v521
      %v690 = vpack.c.b16 %v526, %v522
      %v691 = vpack.c.b16 %v527, %v523
      %v692 = vpack.c.b16 %v528, %v524
      %v693 = vpack.c.b16 %v533, %v529
      %v694 = vpack.c.b16 %v534, %v530
      %v695 = vpack.c.b16 %v535, %v531
      %v696 = vpack.c.b16 %v536, %v532
      %v697 = vpack.c.b16 %v541, %v537
      %v698 = vpack.c.b16 %v542, %v538
      %v699 = vpack.c.b16 %v543, %v539
      %v700 = vpack.c.b16 %v544, %v540
      %v701 = vpack.c.b16 %v549, %v545
      %v702 = vpack.c.b16 %v550, %v546
      %v703 = vpack.c.b16 %v551, %v547
      %v704 = vpack.c.b16 %v552, %v548
      %v705 = vpack.c.b16 %v557, %v553
      %v706 = vpack.c.b16 %v558, %v554
      %v707 = vpack.c.b16 %v559, %v555
      %v708 = vpack.c.b16 %v560, %v556
      %v709 = vpack.c.b16 %v565, %v561
      %v710 = vpack.c.b16 %v566, %v562
      %v711 = vpack.c.b16 %v567, %v563
      %v712 = vpack.c.b16 %v568, %v564
      %v713 = vpack.c.b16 %v573, %v569
      %v714 = vpack.c.b16 %v574, %v570
      %v715 = vpack.c.b16 %v575, %v571
      %v716 = vpack.c.b16 %v576, %v572
      %v717 = vpack.c.b16 %v581, %v577
      %v718 = vpack.c.b16 %v582, %v578
      %v719 = vpack.c.b16 %v583, %v579
      %v720 = vpack.c.b16 %v584, %v580
      %v721 = vpack.c.b16 %v589, %v585
      %v722 = vpack.c.b16 %v590, %v586
      %v723 = vpack.c.b16 %v591, %v587
      %v724 = vpack.c.b16 %v592, %v588
      %v725 = vpack.c.b16 %v597, %v593
      %v726 = vpack.c.b16 %v598, %v594
      %v727 = vpack.c.b16 %v599, %v595
      %v728 = vpack.c.b16 %v600, %v596
      %v729 = vpack.c.b16 %v605, %v601
      %v730 = vpack.c.b16 %v606, %v602
      %v731 = vpack.c.b16 %v607, %v603
      %v732 = vpack.c.b16 %v608, %v604
      %v733 = vpack.c.b16 %v613, %v609
      %v734 = vpack.c.b16 %v614, %v610
      %v735 = vpack.c.b16 %v615, %v611
      %v736 = vpack.c.b16 %v616, %v612
      %v737 = vpack.c.b16 %v621, %v617
      %v738 = vpack.c.b16 %v622, %v618
      %v739 = vpack.c.b16 %v623, %v619
      %v740 = vpack.c.b16 %v624, %v620
      %v741 = vpack.c.b16 %v629, %v625
      %v742 = vpack.c.b16 %v630, %v626
      %v743 = vpack.c.b16 %v631, %v627
      %v744 = vpack.c.b16 %v632, %v628
      %v745 = vpack.c.b16 %v637, %v633
      %v746 = vpack.c.b16 %v638, %v634
      %v747 = vpack.c.b16 %v639, %v635
      %v748 = vpack.c.b16 %v640, %v636
      %v749 = vpack.c.b16 %v645, %v641
      %v750 = vpack.c.b16 %v646, %v642
      %v751 = vpack.c.b16 %v647, %v643
      %v752 = vpack.c.b16 %v648, %v644
      %v753 = vpack.c.b16 %v653, %v649
      %v754 = vpack.c.b16 %v654, %v650
      %v755 = vpack.c.b16 %v655, %v651
      %v756 = vpack.c.b16 %v656, %v652
      %v757 = vpack.c.b16 %v661, %v657
      %v758 = vpack.c.b16 %v662, %v658
      %v759 = vpack.c.b16 %v663, %v659
      %v760 = vpack.c.b16 %v664, %v660
      %857 = vmatpush.bf16.msra.mxu0 %v693
      %858 = vmatpush.bf16.msra.mxu0 %v689
      %859 = vmatpush.bf16.msra.mxu0 %v685
      %860 = vmatpush.bf16.msra.mxu0 %v681
      %861 = vmatpush.bf16.msra.mxu0 %v677
      %862 = vmatpush.bf16.msra.mxu0 %v673
      %863 = vmatpush.bf16.msra.mxu0 %v669
      %864 = vmatpush.bf16.msra.mxu0 %v665
      %865 = vmatmul.bf16.gmra.mxu0 %v365
      %v866 = vpop.f32.mrf.mxu0
      %v867 = vadd.f32 %v337, %v866
      %v868 = vpop.f32.mrf.mxu0
      %v869 = vadd.f32 %v337, %v868
      %870 = vmatmul.bf16.gmra.mxu0 %v368
      %v871 = vpop.f32.mrf.mxu0
      %v872 = vadd.f32 %v337, %v871
      %v873 = vpop.f32.mrf.mxu0
      %v874 = vadd.f32 %v337, %v873
      %875 = vdwg.mxu0
      %876 = vmatpush.bf16.msra.mxu0 %v725
      %877 = vmatpush.bf16.msra.mxu0 %v721
      %878 = vmatpush.bf16.msra.mxu0 %v717
      %879 = vmatpush.bf16.msra.mxu0 %v713
      %880 = vmatpush.bf16.msra.mxu0 %v709
      %881 = vmatpush.bf16.msra.mxu0 %v705
      %882 = vmatpush.bf16.msra.mxu0 %v701
      %883 = vmatpush.bf16.msra.mxu0 %v697
      %884 = vmatmul.bf16.gmra.mxu0 %v366
      %v885 = vpop.f32.mrf.mxu0
      %v886 = vadd.f32 %v867, %v885
      %v887 = vpop.f32.mrf.mxu0
      %v888 = vadd.f32 %v869, %v887
      %889 = vmatmul.bf16.gmra.mxu0 %v369
      %v890 = vpop.f32.mrf.mxu0
      %v891 = vadd.f32 %v872, %v890
      %v892 = vpop.f32.mrf.mxu0
      %v893 = vadd.f32 %v874, %v892
      %894 = vdwg.mxu0
      %895 = vmatpush.bf16.msra.mxu0 %v757
      %896 = vmatpush.bf16.msra.mxu0 %v753
      %897 = vmatpush.bf16.msra.mxu0 %v749
      %898 = vmatpush.bf16.msra.mxu0 %v745
      %899 = vmatpush.bf16.msra.mxu0 %v741
      %900 = vmatpush.bf16.msra.mxu0 %v737
      %901 = vmatpush.bf16.msra.mxu0 %v733
      %902 = vmatpush.bf16.msra.mxu0 %v729
      %903 = vmatmul.bf16.gmra.mxu0 %v367
      %v904 = vpop.f32.mrf.mxu0
      %v905 = vadd.f32 %v886, %v904
      %v906 = vpop.f32.mrf.mxu0
      %v907 = vadd.f32 %v888, %v906
      %908 = vmatmul.bf16.gmra.mxu0 %v370
      %v909 = vpop.f32.mrf.mxu0
      %v910 = vadd.f32 %v891, %v909
      %v911 = vpop.f32.mrf.mxu0
      %v912 = vadd.f32 %v893, %v911
      %913 = vdwg.mxu0
      %914 = vmatpush.bf16.msra.mxu0 %v694
      %915 = vmatpush.bf16.msra.mxu0 %v690
      %916 = vmatpush.bf16.msra.mxu0 %v686
      %917 = vmatpush.bf16.msra.mxu0 %v682
      %918 = vmatpush.bf16.msra.mxu0 %v678
      %919 = vmatpush.bf16.msra.mxu0 %v674
      %920 = vmatpush.bf16.msra.mxu0 %v670
      %921 = vmatpush.bf16.msra.mxu0 %v666
      %922 = vmatmul.bf16.gmra.mxu0 %v365
      %v923 = vpop.f32.mrf.mxu0
      %v924 = vadd.f32 %v338, %v923
      %v925 = vpop.f32.mrf.mxu0
      %v926 = vadd.f32 %v338, %v925
      %927 = vmatmul.bf16.gmra.mxu0 %v368
      %v928 = vpop.f32.mrf.mxu0
      %v929 = vadd.f32 %v338, %v928
      %v930 = vpop.f32.mrf.mxu0
      %v931 = vadd.f32 %v338, %v930
      %932 = vdwg.mxu0
      %933 = vmatpush.bf16.msra.mxu0 %v726
      %934 = vmatpush.bf16.msra.mxu0 %v722
      %935 = vmatpush.bf16.msra.mxu0 %v718
      %936 = vmatpush.bf16.msra.mxu0 %v714
      %937 = vmatpush.bf16.msra.mxu0 %v710
      %938 = vmatpush.bf16.msra.mxu0 %v706
      %939 = vmatpush.bf16.msra.mxu0 %v702
      %940 = vmatpush.bf16.msra.mxu0 %v698
      %941 = vmatmul.bf16.gmra.mxu0 %v366
      %v942 = vpop.f32.mrf.mxu0
      %v943 = vadd.f32 %v924, %v942
      %v944 = vpop.f32.mrf.mxu0
      %v945 = vadd.f32 %v926, %v944
      %946 = vmatmul.bf16.gmra.mxu0 %v369
      %v947 = vpop.f32.mrf.mxu0
      %v948 = vadd.f32 %v929, %v947
      %v949 = vpop.f32.mrf.mxu0
      %v950 = vadd.f32 %v931, %v949
      %951 = vdwg.mxu0
      %952 = vmatpush.bf16.msra.mxu0 %v758
      %953 = vmatpush.bf16.msra.mxu0 %v754
      %954 = vmatpush.bf16.msra.mxu0 %v750
      %955 = vmatpush.bf16.msra.mxu0 %v746
      %956 = vmatpush.bf16.msra.mxu0 %v742
      %957 = vmatpush.bf16.msra.mxu0 %v738
      %958 = vmatpush.bf16.msra.mxu0 %v734
      %959 = vmatpush.bf16.msra.mxu0 %v730
      %960 = vmatmul.bf16.gmra.mxu0 %v367
      %v961 = vpop.f32.mrf.mxu0
      %v962 = vadd.f32 %v943, %v961
      %v963 = vpop.f32.mrf.mxu0
      %v964 = vadd.f32 %v945, %v963
      %965 = vmatmul.bf16.gmra.mxu0 %v370
      %v966 = vpop.f32.mrf.mxu0
      %v967 = vadd.f32 %v948, %v966
      %v968 = vpop.f32.mrf.mxu0
      %v969 = vadd.f32 %v950, %v968
      %970 = vdwg.mxu0
      %971 = vmatpush.bf16.msra.mxu0 %v695
      %972 = vmatpush.bf16.msra.mxu0 %v691
      %973 = vmatpush.bf16.msra.mxu0 %v687
      %974 = vmatpush.bf16.msra.mxu0 %v683
      %975 = vmatpush.bf16.msra.mxu0 %v679
      %976 = vmatpush.bf16.msra.mxu0 %v675
      %977 = vmatpush.bf16.msra.mxu0 %v671
      %978 = vmatpush.bf16.msra.mxu0 %v667
      %979 = vmatmul.bf16.gmra.mxu0 %v365
      %v980 = vpop.f32.mrf.mxu0
      %v981 = vadd.f32 %v339, %v980
      %v982 = vpop.f32.mrf.mxu0
      %v983 = vadd.f32 %v339, %v982
      %984 = vmatmul.bf16.gmra.mxu0 %v368
      %v985 = vpop.f32.mrf.mxu0
      %v986 = vadd.f32 %v339, %v985
      %v987 = vpop.f32.mrf.mxu0
      %v988 = vadd.f32 %v339, %v987
      %989 = vdwg.mxu0
      %990 = vmatpush.bf16.msra.mxu0 %v727
      %991 = vmatpush.bf16.msra.mxu0 %v723
      %992 = vmatpush.bf16.msra.mxu0 %v719
      %993 = vmatpush.bf16.msra.mxu0 %v715
      %994 = vmatpush.bf16.msra.mxu0 %v711
      %995 = vmatpush.bf16.msra.mxu0 %v707
      %996 = vmatpush.bf16.msra.mxu0 %v703
      %997 = vmatpush.bf16.msra.mxu0 %v699
      %998 = vmatmul.bf16.gmra.mxu0 %v366
      %v999 = vpop.f32.mrf.mxu0
      %v1000 = vadd.f32 %v981, %v999
      %v1001 = vpop.f32.mrf.mxu0
      %v1002 = vadd.f32 %v983, %v1001
      %1003 = vmatmul.bf16.gmra.mxu0 %v369
      %v1004 = vpop.f32.mrf.mxu0
      %v1005 = vadd.f32 %v986, %v1004
      %v1006 = vpop.f32.mrf.mxu0
      %v1007 = vadd.f32 %v988, %v1006
      %1008 = vdwg.mxu0
      %1009 = vmatpush.bf16.msra.mxu0 %v759
      %1010 = vmatpush.bf16.msra.mxu0 %v755
      %1011 = vmatpush.bf16.msra.mxu0 %v751
      %1012 = vmatpush.bf16.msra.mxu0 %v747
      %1013 = vmatpush.bf16.msra.mxu0 %v743
      %1014 = vmatpush.bf16.msra.mxu0 %v739
      %1015 = vmatpush.bf16.msra.mxu0 %v735
      %1016 = vmatpush.bf16.msra.mxu0 %v731
      %1017 = vmatmul.bf16.gmra.mxu0 %v367
      %v1018 = vpop.f32.mrf.mxu0
      %v1019 = vadd.f32 %v1000, %v1018
      %v1020 = vpop.f32.mrf.mxu0
      %v1021 = vadd.f32 %v1002, %v1020
      %1022 = vmatmul.bf16.gmra.mxu0 %v370
      %v1023 = vpop.f32.mrf.mxu0
      %v1024 = vadd.f32 %v1005, %v1023
      %v1025 = vpop.f32.mrf.mxu0
      %v1026 = vadd.f32 %v1007, %v1025
      %1027 = vdwg.mxu0
      %1028 = vmatpush.bf16.msra.mxu0 %v696
      %1029 = vmatpush.bf16.msra.mxu0 %v692
      %1030 = vmatpush.bf16.msra.mxu0 %v688
      %1031 = vmatpush.bf16.msra.mxu0 %v684
      %1032 = vmatpush.bf16.msra.mxu0 %v680
      %1033 = vmatpush.bf16.msra.mxu0 %v676
      %1034 = vmatpush.bf16.msra.mxu0 %v672
      %1035 = vmatpush.bf16.msra.mxu0 %v668
      %1036 = vmatmul.bf16.gmra.mxu0 %v365
      %v1037 = vpop.f32.mrf.mxu0
      %v1038 = vadd.f32 %v340, %v1037
      %v1039 = vpop.f32.mrf.mxu0
      %v1040 = vadd.f32 %v340, %v1039
      %1041 = vmatmul.bf16.gmra.mxu0 %v368
      %v1042 = vpop.f32.mrf.mxu0
      %v1043 = vadd.f32 %v340, %v1042
      %v1044 = vpop.f32.mrf.mxu0
      %v1045 = vadd.f32 %v340, %v1044
      %1046 = vdwg.mxu0
      %1047 = vmatpush.bf16.msra.mxu0 %v728
      %1048 = vmatpush.bf16.msra.mxu0 %v724
      %1049 = vmatpush.bf16.msra.mxu0 %v720
      %1050 = vmatpush.bf16.msra.mxu0 %v716
      %1051 = vmatpush.bf16.msra.mxu0 %v712
      %1052 = vmatpush.bf16.msra.mxu0 %v708
      %1053 = vmatpush.bf16.msra.mxu0 %v704
      %1054 = vmatpush.bf16.msra.mxu0 %v700
      %1055 = vmatmul.bf16.gmra.mxu0 %v366
      %v1056 = vpop.f32.mrf.mxu0
      %v1057 = vadd.f32 %v1038, %v1056
      %v1058 = vpop.f32.mrf.mxu0
      %v1059 = vadd.f32 %v1040, %v1058
      %1060 = vmatmul.bf16.gmra.mxu0 %v369
      %v1061 = vpop.f32.mrf.mxu0
      %v1062 = vadd.f32 %v1043, %v1061
      %v1063 = vpop.f32.mrf.mxu0
      %v1064 = vadd.f32 %v1045, %v1063
      %1065 = vdwg.mxu0
      %1066 = vmatpush.bf16.msra.mxu0 %v760
      %1067 = vmatpush.bf16.msra.mxu0 %v756
      %1068 = vmatpush.bf16.msra.mxu0 %v752
      %1069 = vmatpush.bf16.msra.mxu0 %v748
      %1070 = vmatpush.bf16.msra.mxu0 %v744
      %1071 = vmatpush.bf16.msra.mxu0 %v740
      %1072 = vmatpush.bf16.msra.mxu0 %v736
      %1073 = vmatpush.bf16.msra.mxu0 %v732
      %1074 = vmatmul.bf16.gmra.mxu0 %v367
      %v1075 = vpop.f32.mrf.mxu0
      %v1076 = vadd.f32 %v1057, %v1075
      %v1077 = vpop.f32.mrf.mxu0
      %v1078 = vadd.f32 %v1059, %v1077
      %1079 = vmatmul.bf16.gmra.mxu0 %v370
      %v1080 = vpop.f32.mrf.mxu0
      %v1081 = vadd.f32 %v1062, %v1080
      %v1082 = vpop.f32.mrf.mxu0
      %v1083 = vadd.f32 %v1064, %v1082
      %1084 = vdwg.mxu0
      %v1085 = vmax.f32 %v905, 0.0
      %v1086 = vmax.f32 %v962, 0.0
      %v1087 = vmax.f32 %v1019, 0.0
      %v1088 = vmax.f32 %v1076, 0.0
      %v1089 = vmax.f32 %v907, 0.0
      %v1090 = vmax.f32 %v964, 0.0
      %v1091 = vmax.f32 %v1021, 0.0
      %v1092 = vmax.f32 %v1078, 0.0
      %v1093 = vmax.f32 %v910, 0.0
      %v1094 = vmax.f32 %v967, 0.0
      %v1095 = vmax.f32 %v1024, 0.0
      %v1096 = vmax.f32 %v1081, 0.0
      %v1097 = vmax.f32 %v912, 0.0
      %v1098 = vmax.f32 %v969, 0.0
      %v1099 = vmax.f32 %v1026, 0.0
      %v1100 = vmax.f32 %v1083, 0.0
      %v1101 = vpack.c.bf16 %v1089, %v1085
      %v1102 = vpack.c.bf16 %v1090, %v1086
      %v1103 = vpack.c.bf16 %v1091, %v1087
      %v1104 = vpack.c.bf16 %v1092, %v1088
      %v1105 = vpack.c.bf16 %v1097, %v1093
      %v1106 = vpack.c.bf16 %v1098, %v1094
      %v1107 = vpack.c.bf16 %v1099, %v1095
      %v1108 = vpack.c.bf16 %v1100, %v1096
      %v1109 = vld [vmem:[%s3] sm:$0xf]
      %v1110 = vld [vmem:[%s3 + $0x4] sm:$0xf]
      %v1111 = vld [vmem:[%s3 + $0x8] sm:$0xf]
      %v1112 = vld [vmem:[%s3 + $0xc] sm:$0xf]
      %v1113 = vld [vmem:[%s3 + $0x10] sm:$0xf]
      %v1114 = vld [vmem:[%s3 + $0x14] sm:$0xf]
      %v1115 = vld [vmem:[%s3 + $0x18] sm:$0xf]
      %v1116 = vld [vmem:[%s3 + $0x1c] sm:$0xf]
      %v1117 = vld [vmem:[%s3 + $0x20] sm:$0xf]
      %v1118 = vld [vmem:[%s3 + $0x24] sm:$0xf]
      %v1119 = vld [vmem:[%s3 + $0x28] sm:$0xf]
      %v1120 = vld [vmem:[%s3 + $0x2c] sm:$0xf]
      %v1121 = vld [vmem:[%s3 + $0x30] sm:$0xf]
      %v1122 = vld [vmem:[%s3 + $0x34] sm:$0xf]
      %v1123 = vld [vmem:[%s3 + $0x38] sm:$0xf]
      %v1124 = vld [vmem:[%s3 + $0x3c] sm:$0xf]
      %v1125 = vld [vmem:[%s3 + $0x40] sm:$0xf]
      %v1126 = vld [vmem:[%s3 + $0x44] sm:$0xf]
      %v1127 = vld [vmem:[%s3 + $0x48] sm:$0xf]
      %v1128 = vld [vmem:[%s3 + $0x4c] sm:$0xf]
      %v1129 = vld [vmem:[%s3 + $0x50] sm:$0xf]
      %v1130 = vld [vmem:[%s3 + $0x54] sm:$0xf]
      %v1131 = vld [vmem:[%s3 + $0x58] sm:$0xf]
      %v1132 = vld [vmem:[%s3 + $0x5c] sm:$0xf]
      %v1133 = vld [vmem:[%s3 + $0x60] sm:$0xf]
      %v1134 = vld [vmem:[%s3 + $0x64] sm:$0xf]
      %v1135 = vld [vmem:[%s3 + $0x68] sm:$0xf]
      %v1136 = vld [vmem:[%s3 + $0x6c] sm:$0xf]
      %v1137 = vld [vmem:[%s3 + $0x70] sm:$0xf]
      %v1138 = vld [vmem:[%s3 + $0x74] sm:$0xf]
      %v1139 = vld [vmem:[%s3 + $0x78] sm:$0xf]
      %v1140 = vld [vmem:[%s3 + $0x7c] sm:$0xf]
      %v1141 = vld [vmem:[%s3 + $0x80] sm:$0xf]
      %v1142 = vld [vmem:[%s3 + $0x84] sm:$0xf]
      %v1143 = vld [vmem:[%s3 + $0x88] sm:$0xf]
      %v1144 = vld [vmem:[%s3 + $0x8c] sm:$0xf]
      %v1145 = vld [vmem:[%s3 + $0x90] sm:$0xf]
      %v1146 = vld [vmem:[%s3 + $0x94] sm:$0xf]
      %v1147 = vld [vmem:[%s3 + $0x98] sm:$0xf]
      %v1148 = vld [vmem:[%s3 + $0x9c] sm:$0xf]
      %v1149 = vld [vmem:[%s3 + $0xa0] sm:$0xf]
      %v1150 = vld [vmem:[%s3 + $0xa4] sm:$0xf]
      %v1151 = vld [vmem:[%s3 + $0xa8] sm:$0xf]
      %v1152 = vld [vmem:[%s3 + $0xac] sm:$0xf]
      %v1153 = vld [vmem:[%s3 + $0xb0] sm:$0xf]
      %v1154 = vld [vmem:[%s3 + $0xb4] sm:$0xf]
      %v1155 = vld [vmem:[%s3 + $0xb8] sm:$0xf]
      %v1156 = vld [vmem:[%s3 + $0xbc] sm:$0xf]
      %v1157 = vld [vmem:[%s3 + $0xc0] sm:$0xf]
      %v1158 = vld [vmem:[%s3 + $0xc4] sm:$0xf]
      %v1159 = vld [vmem:[%s3 + $0xc8] sm:$0xf]
      %v1160 = vld [vmem:[%s3 + $0xcc] sm:$0xf]
      %v1161 = vld [vmem:[%s3 + $0xd0] sm:$0xf]
      %v1162 = vld [vmem:[%s3 + $0xd4] sm:$0xf]
      %v1163 = vld [vmem:[%s3 + $0xd8] sm:$0xf]
      %v1164 = vld [vmem:[%s3 + $0xdc] sm:$0xf]
      %v1165 = vld [vmem:[%s3 + $0xe0] sm:$0xf]
      %v1166 = vld [vmem:[%s3 + $0xe4] sm:$0xf]
      %v1167 = vld [vmem:[%s3 + $0xe8] sm:$0xf]
      %v1168 = vld [vmem:[%s3 + $0xec] sm:$0xf]
      %v1169 = vld [vmem:[%s3 + $0xf0] sm:$0xf]
      %v1170 = vld [vmem:[%s3 + $0xf4] sm:$0xf]
      %v1171 = vld [vmem:[%s3 + $0xf8] sm:$0xf]
      %v1172 = vld [vmem:[%s3 + $0xfc] sm:$0xf]
      %v1173 = vld [vmem:[%s4] sm:$0x1]
      %v1175 = vperm.slane %v1173, 0
      %v1241 = vunpack.c.l.b16 %v1109
      %v1242 = vunpack.c.l.b16 %v1110
      %v1243 = vunpack.c.l.b16 %v1111
      %v1244 = vunpack.c.l.b16 %v1112
      %v1245 = vunpack.c.l.b16 %v1113
      %v1246 = vunpack.c.l.b16 %v1114
      %v1247 = vunpack.c.l.b16 %v1115
      %v1248 = vunpack.c.l.b16 %v1116
      %v1249 = vunpack.c.l.b16 %v1117
      %v1250 = vunpack.c.l.b16 %v1118
      %v1251 = vunpack.c.l.b16 %v1119
      %v1252 = vunpack.c.l.b16 %v1120
      %v1253 = vunpack.c.l.b16 %v1121
      %v1254 = vunpack.c.l.b16 %v1122
      %v1255 = vunpack.c.l.b16 %v1123
      %v1256 = vunpack.c.l.b16 %v1124
      %v1257 = vunpack.c.l.b16 %v1125
      %v1258 = vunpack.c.l.b16 %v1126
      %v1259 = vunpack.c.l.b16 %v1127
      %v1260 = vunpack.c.l.b16 %v1128
      %v1261 = vunpack.c.l.b16 %v1129
      %v1262 = vunpack.c.l.b16 %v1130
      %v1263 = vunpack.c.l.b16 %v1131
      %v1264 = vunpack.c.l.b16 %v1132
      %v1265 = vunpack.c.l.b16 %v1133
      %v1266 = vunpack.c.l.b16 %v1134
      %v1267 = vunpack.c.l.b16 %v1135
      %v1268 = vunpack.c.l.b16 %v1136
      %v1269 = vunpack.c.l.b16 %v1137
      %v1270 = vunpack.c.l.b16 %v1138
      %v1271 = vunpack.c.l.b16 %v1139
      %v1272 = vunpack.c.l.b16 %v1140
      %v1273 = vunpack.c.l.b16 %v1141
      %v1274 = vunpack.c.l.b16 %v1142
      %v1275 = vunpack.c.l.b16 %v1143
      %v1276 = vunpack.c.l.b16 %v1144
      %v1277 = vunpack.c.l.b16 %v1145
      %v1278 = vunpack.c.l.b16 %v1146
      %v1279 = vunpack.c.l.b16 %v1147
      %v1280 = vunpack.c.l.b16 %v1148
      %v1281 = vunpack.c.l.b16 %v1149
      %v1282 = vunpack.c.l.b16 %v1150
      %v1283 = vunpack.c.l.b16 %v1151
      %v1284 = vunpack.c.l.b16 %v1152
      %v1285 = vunpack.c.l.b16 %v1153
      %v1286 = vunpack.c.l.b16 %v1154
      %v1287 = vunpack.c.l.b16 %v1155
      %v1288 = vunpack.c.l.b16 %v1156
      %v1289 = vunpack.c.l.b16 %v1157
      %v1290 = vunpack.c.l.b16 %v1158
      %v1291 = vunpack.c.l.b16 %v1159
      %v1292 = vunpack.c.l.b16 %v1160
      %v1293 = vunpack.c.l.b16 %v1161
      %v1294 = vunpack.c.l.b16 %v1162
      %v1295 = vunpack.c.l.b16 %v1163
      %v1296 = vunpack.c.l.b16 %v1164
      %v1297 = vunpack.c.l.b16 %v1165
      %v1298 = vunpack.c.l.b16 %v1166
      %v1299 = vunpack.c.l.b16 %v1167
      %v1300 = vunpack.c.l.b16 %v1168
      %v1301 = vunpack.c.l.b16 %v1169
      %v1302 = vunpack.c.l.b16 %v1170
      %v1303 = vunpack.c.l.b16 %v1171
      %v1304 = vunpack.c.l.b16 %v1172
      %v1305 = vpack.c.b16 %v1242, %v1241
      %v1306 = vpack.c.b16 %v1244, %v1243
      %v1307 = vpack.c.b16 %v1246, %v1245
      %v1308 = vpack.c.b16 %v1248, %v1247
      %v1309 = vpack.c.b16 %v1250, %v1249
      %v1310 = vpack.c.b16 %v1252, %v1251
      %v1311 = vpack.c.b16 %v1254, %v1253
      %v1312 = vpack.c.b16 %v1256, %v1255
      %v1313 = vpack.c.b16 %v1258, %v1257
      %v1314 = vpack.c.b16 %v1260, %v1259
      %v1315 = vpack.c.b16 %v1262, %v1261
      %v1316 = vpack.c.b16 %v1264, %v1263
      %v1317 = vpack.c.b16 %v1266, %v1265
      %v1318 = vpack.c.b16 %v1268, %v1267
      %v1319 = vpack.c.b16 %v1270, %v1269
      %v1320 = vpack.c.b16 %v1272, %v1271
      %v1321 = vpack.c.b16 %v1274, %v1273
      %v1322 = vpack.c.b16 %v1276, %v1275
      %v1323 = vpack.c.b16 %v1278, %v1277
      %v1324 = vpack.c.b16 %v1280, %v1279
      %v1325 = vpack.c.b16 %v1282, %v1281
      %v1326 = vpack.c.b16 %v1284, %v1283
      %v1327 = vpack.c.b16 %v1286, %v1285
      %v1328 = vpack.c.b16 %v1288, %v1287
      %v1329 = vpack.c.b16 %v1290, %v1289
      %v1330 = vpack.c.b16 %v1292, %v1291
      %v1331 = vpack.c.b16 %v1294, %v1293
      %v1332 = vpack.c.b16 %v1296, %v1295
      %v1333 = vpack.c.b16 %v1298, %v1297
      %v1334 = vpack.c.b16 %v1300, %v1299
      %v1335 = vpack.c.b16 %v1302, %v1301
      %v1336 = vpack.c.b16 %v1304, %v1303
      %1369 = vmatpush.bf16.msra.mxu0 %v1312
      %1370 = vmatpush.bf16.msra.mxu0 %v1311
      %1371 = vmatpush.bf16.msra.mxu0 %v1310
      %1372 = vmatpush.bf16.msra.mxu0 %v1309
      %1373 = vmatpush.bf16.msra.mxu0 %v1308
      %1374 = vmatpush.bf16.msra.mxu0 %v1307
      %1375 = vmatpush.bf16.msra.mxu0 %v1306
      %1376 = vmatpush.bf16.msra.mxu0 %v1305
      %1377 = vmatmul.bf16.gmra.mxu0 %v1101
      %v1378 = vpop.f32.mrf.mxu0
      %v1379 = vadd.f32 %v1175, %v1378
      %v1380 = vpop.f32.mrf.mxu0
      %v1381 = vadd.f32 %v1175, %v1380
      %1382 = vmatmul.bf16.gmra.mxu0 %v1105
      %v1383 = vpop.f32.mrf.mxu0
      %v1384 = vadd.f32 %v1175, %v1383
      %v1385 = vpop.f32.mrf.mxu0
      %v1386 = vadd.f32 %v1175, %v1385
      %1387 = vdwg.mxu0
      %1388 = vmatpush.bf16.msra.mxu0 %v1320
      %1389 = vmatpush.bf16.msra.mxu0 %v1319
      %1390 = vmatpush.bf16.msra.mxu0 %v1318
      %1391 = vmatpush.bf16.msra.mxu0 %v1317
      %1392 = vmatpush.bf16.msra.mxu0 %v1316
      %1393 = vmatpush.bf16.msra.mxu0 %v1315
      %1394 = vmatpush.bf16.msra.mxu0 %v1314
      %1395 = vmatpush.bf16.msra.mxu0 %v1313
      %1396 = vmatmul.bf16.gmra.mxu0 %v1102
      %v1397 = vpop.f32.mrf.mxu0
      %v1398 = vadd.f32 %v1379, %v1397
      %v1399 = vpop.f32.mrf.mxu0
      %v1400 = vadd.f32 %v1381, %v1399
      %1401 = vmatmul.bf16.gmra.mxu0 %v1106
      %v1402 = vpop.f32.mrf.mxu0
      %v1403 = vadd.f32 %v1384, %v1402
      %v1404 = vpop.f32.mrf.mxu0
      %v1405 = vadd.f32 %v1386, %v1404
      %1406 = vdwg.mxu0
      %1407 = vmatpush.bf16.msra.mxu0 %v1328
      %1408 = vmatpush.bf16.msra.mxu0 %v1327
      %1409 = vmatpush.bf16.msra.mxu0 %v1326
      %1410 = vmatpush.bf16.msra.mxu0 %v1325
      %1411 = vmatpush.bf16.msra.mxu0 %v1324
      %1412 = vmatpush.bf16.msra.mxu0 %v1323
      %1413 = vmatpush.bf16.msra.mxu0 %v1322
      %1414 = vmatpush.bf16.msra.mxu0 %v1321
      %1415 = vmatmul.bf16.gmra.mxu0 %v1103
      %v1416 = vpop.f32.mrf.mxu0
      %v1417 = vadd.f32 %v1398, %v1416
      %v1418 = vpop.f32.mrf.mxu0
      %v1419 = vadd.f32 %v1400, %v1418
      %1420 = vmatmul.bf16.gmra.mxu0 %v1107
      %v1421 = vpop.f32.mrf.mxu0
      %v1422 = vadd.f32 %v1403, %v1421
      %v1423 = vpop.f32.mrf.mxu0
      %v1424 = vadd.f32 %v1405, %v1423
      %1425 = vdwg.mxu0
      %1426 = vmatpush.bf16.msra.mxu0 %v1336
      %1427 = vmatpush.bf16.msra.mxu0 %v1335
      %1428 = vmatpush.bf16.msra.mxu0 %v1334
      %1429 = vmatpush.bf16.msra.mxu0 %v1333
      %1430 = vmatpush.bf16.msra.mxu0 %v1332
      %1431 = vmatpush.bf16.msra.mxu0 %v1331
      %1432 = vmatpush.bf16.msra.mxu0 %v1330
      %1433 = vmatpush.bf16.msra.mxu0 %v1329
      %1434 = vmatmul.bf16.gmra.mxu0 %v1104
      %v1435 = vpop.f32.mrf.mxu0
      %v1436 = vadd.f32 %v1417, %v1435
      %v1437 = vpop.f32.mrf.mxu0
      %v1438 = vadd.f32 %v1419, %v1437
      %1439 = vmatmul.bf16.gmra.mxu0 %v1108
      %v1440 = vpop.f32.mrf.mxu0
      %v1441 = vadd.f32 %v1422, %v1440
      %v1442 = vpop.f32.mrf.mxu0
      %v1443 = vadd.f32 %v1424, %v1442
      %1444 = vdwg.mxu0
      %1445 = vst [vmem:[%s229] sm:$0xff] %v1436
      %1446 = vst [vmem:[%s229 + $0x8] sm:$0xff] %v1438
      %1447 = vst [vmem:[%s229 + $0x10] sm:$0xff] %v1441
      %1448 = vst [vmem:[%s229 + $0x18] sm:$0xff] %v1443
      %s1449 = smul.u32 4, %s16
      %p1450 = scmp.lt.s32.totalorder %s1449, 31
      %s1451 = scalar_select %p1450, %s1449, 31
      %s1452 = smul.addr %s1451, 8
      %s1453 = scalar_lea.vmem %s5, %s1452
      // Predicated region
      $region41: #{conv1d_linear.1} parent=39 // pred_check
        %p1454 = pneg %p144
      $region42: #{conv1d_linear.1} parent=39 // pred_check_branch
        %1456 = sbr.rel (%p1454) target = $region44
      $region43: #{conv1d_linear.1} parent=39 // pred_region
        %s1457 = smul.u32 4, %s16
      $region44: #{conv1d_linear.1} parent=39 // pred_fallthru
        _
    $region40: #{conv1d_linear.1} parent=5 // pred_fallthru
      _
    %p1458 = scmp.le.s32.totalorder 2, %s11
    // Predicated region
    $region45: #{conv1d_linear.1} parent=5 // pred_check
      %p1459 = pneg %p1458
    $region46: #{conv1d_linear.1} parent=5 // pred_check_branch
      %1461 = sbr.rel (%p1459) target = $region48
    $region47: #{conv1d_linear.1} parent=5 // pred_region
      %s1462 = ssub.s32 %s11, 2
      // Predicated region
      $region49: #{conv1d_linear.1} parent=47 // pred_check
        %p1463 = pneg %p150
      $region50: #{conv1d_linear.1} parent=47 // pred_check_branch
        %1465 = sbr.rel (%p1463) target = $region52
      $region51: #{conv1d_linear.1} parent=47 // pred_region
        %s1466 = smul.u32 4, %s17
        %p1467 = scmp.lt.s32.totalorder %s1466, 31
        %s1468 = scalar_select %p1467, %s1466, 31
        %s1469 = smul.addr %s1468, 8
        %s1470 = scalar_lea.vmem %s5, %s1469
      $region52: #{conv1d_linear.1} parent=47 // pred_fallthru
        _
    $region48: #{conv1d_linear.1} parent=5 // pred_fallthru
      _
  $region6: #{conv1d_linear.1} parent=0 // loop_footer
    %s15 = sadd.s32 1, %s11
  $region7: #{conv1d_linear.1} parent=0 // loop_footer_branch
    %10 = sbr.rel target = $region3
  $region8: #{conv1d_linear.1} parent=0 // loop_exit
    _

</llo_original>
